<compile_context>
chip_gen: v7x
topology: tpu7x:2x2x1
jax: 0.10.0
libtpu: 0.0.40
codegen_flags: <defaults>
</compile_context>

<pallas_src>
import functools

import jax
import jax.numpy as jnp
from jax.experimental import pallas as pl
from jax.experimental.pallas import tpu as pltpu


def _layernorm(v, g, b, eps=1e-5):
    # Two-pass statistics (matches torch.nn.LayerNorm, avoids E[x^2]-mean^2 cancellation).
    mu = jnp.mean(v, axis=-1, keepdims=True)
    var = jnp.mean((v - mu) * (v - mu), axis=-1, keepdims=True)
    return (v - mu) * jax.lax.rsqrt(var + eps) * g + b


def transformer_block_kernel(
    x_ref, ln1_g_ref, ln1_b_ref, wq_ref, wkt_ref, wv_ref, wproj_ref, bproj_ref,
    ln2_g_ref, ln2_b_ref, w1_ref, b1_ref, w2_ref, b2_ref,
    o_ref, k_scratch, v_scratch,
    *, n_head, q_tile,
):
    bf16 = jnp.bfloat16
    _, TQ, C = x_ref.shape
    H = n_head
    hs = C // H
    qi = pl.program_id(1)

    # ---- LN1 + head-major Q/K/V projections for this tile (each row processed exactly once) ----
    x_q = x_ref[0]                                                  # (TQ, C) f32
    xn = _layernorm(x_q, ln1_g_ref[...], ln1_b_ref[...])
    xn_b = jnp.broadcast_to(xn.astype(bf16)[None], (H, TQ, C))      # shared LHS for all heads

    # Q (1/sqrt(C) scale pre-folded into wq in the wrapper), head-major (H, TQ, hs).
    q_h = jnp.einsum("hqc,hcd->hqd", xn_b, wq_ref[...],
                     preferred_element_type=jnp.float32).astype(bf16)
    # K produced directly transposed (H, hs, TQ): QK^T contracts the RHS sublane dim.
    k_t = jnp.einsum("hdc,hqc->hdq", wkt_ref[...], xn_b,
                     preferred_element_type=jnp.float32).astype(bf16)
    v_t = jnp.einsum("hqc,hcd->hqd", xn_b, wv_ref[...],
                     preferred_element_type=jnp.float32).astype(bf16)

    # Append this tile's K/V blocks to the per-core cache (leading-dim dynamic index = tile id).
    k_scratch[qi] = k_t
    v_scratch[qi] = v_t

    # ---- flash-style causal attention over KV tiles 0..qi (online softmax) ----
    row = qi * q_tile + jax.lax.broadcasted_iota(jnp.int32, (q_tile, q_tile), 0)

    def kv_step(kj, carry):
        m_i, l_i, acc = carry
        k_blk = k_scratch[kj]                                       # (H, hs, TQ) bf16
        v_blk = v_scratch[kj]                                       # (H, TQ, hs) bf16
        s = jnp.einsum("hqd,hdk->hqk", q_h, k_blk,
                       preferred_element_type=jnp.float32)          # (H, TQ, TQ) f32
        col = kj * q_tile + jax.lax.broadcasted_iota(jnp.int32, (q_tile, q_tile), 1)
        s = jnp.where((row >= col)[None, :, :], s, -1e30)           # finite fill: no inf-inf NaNs
        m_new = jnp.maximum(m_i, jnp.max(s, axis=-1, keepdims=True))
        alpha = jnp.exp(m_i - m_new)
        p = jnp.exp(s - m_new)
        l_new = alpha * l_i + jnp.sum(p, axis=-1, keepdims=True)
        acc_new = alpha * acc + jnp.einsum("hqk,hkd->hqd", p.astype(bf16), v_blk,
                                           preferred_element_type=jnp.float32)
        return m_new, l_new, acc_new

    m0 = jnp.full((H, q_tile, 1), -jnp.inf, jnp.float32)
    l0 = jnp.zeros((H, q_tile, 1), jnp.float32)
    acc0 = jnp.zeros((H, q_tile, hs), jnp.float32)
    _, l_f, acc_f = jax.lax.fori_loop(0, qi + 1, kv_step, (m0, l0, acc0))

    ctx = acc_f * pl.reciprocal(l_f, approx=True)                   # (H, TQ, hs) f32, EUP recip

    # Output projection: head-batched (hs -> C) matmul, then reduce over heads (VPU adds).
    attn = jnp.sum(
        jnp.einsum("hqd,hdc->hqc", ctx.astype(bf16), wproj_ref[...],
                   preferred_element_type=jnp.float32),
        axis=0) + bproj_ref[...]
    x1 = x_q + attn

    # ---- LN2 + feed-forward (bf16 operands, f32 accumulation / elementwise) ----
    xn2 = _layernorm(x1, ln2_g_ref[...], ln2_b_ref[...])
    h1 = jnp.dot(xn2.astype(bf16), w1_ref[...],
                 preferred_element_type=jnp.float32) + b1_ref[...]
    h1 = jnp.maximum(h1, 0.0)
    ff = jnp.dot(h1.astype(bf16), w2_ref[...],
                 preferred_element_type=jnp.float32) + b2_ref[...]

    o_ref[0] = (x1 + ff).astype(o_ref.dtype)


def _vmem_limit_bytes():
    # Derive the scoped-VMEM limit from the chip (v7x has 64 MiB, v5e/v6e 128 MiB) instead of
    # a single hard-coded number; fall back conservatively if the query is unavailable.
    try:
        cap = int(pltpu.get_tpu_info().vmem_capacity_bytes)
    except Exception:
        cap = 64 * 1024 * 1024
    return min((cap * 3) // 4, 96 * 1024 * 1024)


def transformer_block(x, params, n_head, *, q_tile=None):
    B, T, C = x.shape
    assert C % n_head == 0
    if q_tile is None:
        # 128 matches the 4x128x128 MXU on v5e; worth sweeping 256 on v6e (128 MiB VMEM).
        q_tile = T if T <= 128 else 128
    assert T % q_tile == 0
    num_q = T // q_tile
    H, hs = n_head, C // n_head
    bf16 = jnp.bfloat16
    scale = 1.0 / (C ** 0.5)   # PyTorch module divides scores by sqrt(n_embd), not head_size.

    # Wrapper-side weight prep (pure layout plumbing, zero kernel cost):
    #   head-major reshapes, attention scale folded into wq, matmul weights cast to bf16.
    wq_hm = (params["wq"] * scale).reshape(C, H, hs).transpose(1, 0, 2).astype(bf16)  # (H, C, hs)
    wkt_hm = params["wk"].T.reshape(H, hs, C).astype(bf16)                            # (H, hs, C)
    wv_hm = params["wv"].reshape(C, H, hs).transpose(1, 0, 2).astype(bf16)            # (H, C, hs)
    wproj_hm = params["wproj"].reshape(H, hs, C).astype(bf16)                         # (H, hs, C)

    weights = [
        params["ln1_g"], params["ln1_b"],
        wq_hm, wkt_hm, wv_hm, wproj_hm, params["bproj"],
        params["ln2_g"], params["ln2_b"],
        params["w1"].astype(bf16), params["b1"],
        params["w2"].astype(bf16), params["b2"],
    ]

    def const_spec(arr):
        # Constant block index -> fetched once, stays VMEM-resident across the grid.
        # TODO(synk): add pipeline_mode=pl.Buffered(1) to single-buffer these once verified.
        return pl.BlockSpec(arr.shape, lambda b, qi, _n=arr.ndim: (0,) * _n)

    kernel = functools.partial(transformer_block_kernel, n_head=n_head, q_tile=q_tile)

    grid_spec = pltpu.PrefetchScalarGridSpec(
        num_scalar_prefetch=0,
        grid=(B, num_q),
        in_specs=[pl.BlockSpec((1, q_tile, C), lambda b, qi: (b, qi, 0))]
                 + [const_spec(w) for w in weights],
        out_specs=pl.BlockSpec((1, q_tile, C), lambda b, qi: (b, qi, 0)),
        scratch_shapes=[
            pltpu.VMEM((num_q, H, hs, q_tile), bf16),   # K cache, transposed per-tile blocks
            pltpu.VMEM((num_q, H, q_tile, hs), bf16),   # V cache
        ],
    )

    return pl.pallas_call(
        kernel,
        out_shape=jax.ShapeDtypeStruct((B, T, C), jnp.float32),
        grid_spec=grid_spec,
        compiler_params=pltpu.CompilerParams(
            # The K/V cache is appended at step qi and read by steps >= qi of the same batch
            # element, so the qi axis MUST stay sequential ("arbitrary").  The batch axis is
            # embarrassingly parallel (feeds both TensorCores on v7x when B >= 2).
            dimension_semantics=("parallel", "arbitrary"),
            vmem_limit_bytes=_vmem_limit_bytes(),
        ),
    )(x, *weights)


def init_params(key, n_embd, n_head):
    ks = jax.random.split(key, 8)
    s = 0.02
    return {
        "ln1_g": jnp.ones((1, n_embd), jnp.float32),
        "ln1_b": jnp.zeros((1, n_embd), jnp.float32),
        "wq": s * jax.random.normal(ks[0], (n_embd, n_embd), jnp.float32),
        "wk": s * jax.random.normal(ks[1], (n_embd, n_embd), jnp.float32),
        "wv": s * jax.random.normal(ks[2], (n_embd, n_embd), jnp.float32),
        "wproj": s * jax.random.normal(ks[3], (n_embd, n_embd), jnp.float32),
        "bproj": s * jax.random.normal(ks[4], (1, n_embd), jnp.float32),
        "ln2_g": jnp.ones((1, n_embd), jnp.float32),
        "ln2_b": jnp.zeros((1, n_embd), jnp.float32),
        "w1": s * jax.random.normal(ks[5], (n_embd, 4 * n_embd), jnp.float32),
        "b1": jnp.zeros((1, 4 * n_embd), jnp.float32),
        "w2": s * jax.random.normal(ks[6], (4 * n_embd, n_embd), jnp.float32),
        "b2": jnp.zeros((1, n_embd), jnp.float32),
    }


def reference_block(x, p, n_head):
    # Pure-JAX f32 reference mirroring the PyTorch forward exactly (eval mode, no dropout).
    B, T, C = x.shape
    hs = C // n_head

    def ln(v, g, b):
        mu = jnp.mean(v, axis=-1, keepdims=True)
        var = jnp.mean((v - mu) ** 2, axis=-1, keepdims=True)
        return (v - mu) / jnp.sqrt(var + 1e-5) * g + b

    xn = ln(x, p["ln1_g"], p["ln1_b"])
    mask = jnp.tril(jnp.ones((T, T), bool))
    outs = []
    for h in range(n_head):
        sl = slice(h * hs, (h + 1) * hs)
        q = xn @ p["wq"][:, sl]
        k = xn @ p["wk"][:, sl]
        v = xn @ p["wv"][:, sl]
        wei = jnp.einsum("btd,bsd->bts", q, k) / (C ** 0.5)
        wei = jnp.where(mask, wei, -jnp.inf)
        wei = jax.nn.softmax(wei, axis=-1)
        outs.append(jnp.einsum("bts,bsd->btd", wei, v))
    attn = jnp.concatenate(outs, axis=-1) @ p["wproj"] + p["bproj"]
    x1 = x + attn
    xn2 = ln(x1, p["ln2_g"], p["ln2_b"])
    ff = jnp.maximum(xn2 @ p["w1"] + p["b1"], 0.0) @ p["w2"] + p["b2"]
    return x1 + ff


if __name__ == "__main__":
    # T = 16 with q_tile = 8 exercises the incremental K/V-cache append, the flash-style inner
    # KV loop (trip counts 1 and 2) and the causal diagonal-block masking.
    B, T, C, n_head = 2, 16, 32, 4   # block_size >= T in the PyTorch module
    key = jax.random.PRNGKey(0)
    kx, kp = jax.random.split(key)
    x = jax.random.normal(kx, (B, T, C), jnp.float32)
    params = init_params(kp, C, n_head)

    out = jax.block_until_ready(transformer_block(x, params, n_head, q_tile=8))
    ref = reference_block(x, params, n_head)

    # bf16 matmul operands (f32 accumulation) -> tolerance relaxed vs. a pure-f32 reference.
    max_err = float(jnp.max(jnp.abs(out - ref)))
    assert jnp.allclose(out, ref, atol=2e-2, rtol=2e-2), f"mismatch vs reference, max_err={max_err}"
    print("KERNEL_OK")
</pallas_src>

<mosaic_0001>
module attributes {stable_mosaic.version = 11 : i64} {
  func.func @transformer_block_kernel(%arg0: i32, %arg1: i32, %arg2: memref<1x8x32xf32, #tpu.memory_space<vmem>>, %arg3: memref<1x32xf32, #tpu.memory_space<vmem>>, %arg4: memref<1x32xf32, #tpu.memory_space<vmem>>, %arg5: memref<4x32x8xbf16, #tpu.memory_space<vmem>>, %arg6: memref<4x8x32xbf16, #tpu.memory_space<vmem>>, %arg7: memref<4x32x8xbf16, #tpu.memory_space<vmem>>, %arg8: memref<4x8x32xbf16, #tpu.memory_space<vmem>>, %arg9: memref<1x32xf32, #tpu.memory_space<vmem>>, %arg10: memref<1x32xf32, #tpu.memory_space<vmem>>, %arg11: memref<1x32xf32, #tpu.memory_space<vmem>>, %arg12: memref<32x128xbf16, #tpu.memory_space<vmem>>, %arg13: memref<1x128xf32, #tpu.memory_space<vmem>>, %arg14: memref<128x32xbf16, #tpu.memory_space<vmem>>, %arg15: memref<1x32xf32, #tpu.memory_space<vmem>>, %arg16: memref<1x8x32xf32, #tpu.memory_space<vmem>>, %arg17: memref<2x4x8x8xbf16, #tpu.memory_space<vmem>>, %arg18: memref<2x4x8x8xbf16, #tpu.memory_space<vmem>>) attributes {dimension_semantics = [#tpu.dimension_semantics<parallel>, #tpu.dimension_semantics<arbitrary>], iteration_bounds = array<i64: 2, 2>, scalar_prefetch = 0 : i64, scratch_operands = 2 : i64, tpu.core_type = #tpu.core_type<tc>, window_params = [{transform_indices = @transform_0, window_bounds = array<i64: 1, 8, 32>}, {pipeline_mode = #tpu.pipeline_mode<synchronous>, transform_indices = @transform_1, window_bounds = array<i64: 1, 32>}, {pipeline_mode = #tpu.pipeline_mode<synchronous>, transform_indices = @transform_2, window_bounds = array<i64: 1, 32>}, {pipeline_mode = #tpu.pipeline_mode<synchronous>, transform_indices = @transform_3, window_bounds = array<i64: 4, 32, 8>}, {pipeline_mode = #tpu.pipeline_mode<synchronous>, transform_indices = @transform_4, window_bounds = array<i64: 4, 8, 32>}, {pipeline_mode = #tpu.pipeline_mode<synchronous>, transform_indices = @transform_5, window_bounds = array<i64: 4, 32, 8>}, {pipeline_mode = #tpu.pipeline_mode<synchronous>, transform_indices = @transform_6, window_bounds = array<i64: 4, 8, 32>}, {pipeline_mode = #tpu.pipeline_mode<synchronous>, transform_indices = @transform_7, window_bounds = array<i64: 1, 32>}, {pipeline_mode = #tpu.pipeline_mode<synchronous>, transform_indices = @transform_8, window_bounds = array<i64: 1, 32>}, {pipeline_mode = #tpu.pipeline_mode<synchronous>, transform_indices = @transform_9, window_bounds = array<i64: 1, 32>}, {pipeline_mode = #tpu.pipeline_mode<synchronous>, transform_indices = @transform_10, window_bounds = array<i64: 32, 128>}, {pipeline_mode = #tpu.pipeline_mode<synchronous>, transform_indices = @transform_11, window_bounds = array<i64: 1, 128>}, {pipeline_mode = #tpu.pipeline_mode<synchronous>, transform_indices = @transform_12, window_bounds = array<i64: 128, 32>}, {pipeline_mode = #tpu.pipeline_mode<synchronous>, transform_indices = @transform_13, window_bounds = array<i64: 1, 32>}, {transform_indices = @transform_14, window_bounds = array<i64: 1, 8, 32>}]} {
    %c0 = arith.constant 0 : index
    %c0_0 = arith.constant 0 : index
    %c0_1 = arith.constant 0 : index
    %0 = vector.load %arg2[%c0, %c0_0, %c0_1] : memref<1x8x32xf32, #tpu.memory_space<vmem>>, vector<1x8x32xf32>
    %1 = vector.shape_cast %0 : vector<1x8x32xf32> to vector<8x32xf32>
    %c0_2 = arith.constant 0 : index
    %c0_3 = arith.constant 0 : index
    %2 = vector.load %arg3[%c0_2, %c0_3] : memref<1x32xf32, #tpu.memory_space<vmem>>, vector<1x32xf32>
    %c0_4 = arith.constant 0 : index
    %c0_5 = arith.constant 0 : index
    %3 = vector.load %arg4[%c0_4, %c0_5] : memref<1x32xf32, #tpu.memory_space<vmem>>, vector<1x32xf32>
    %cst = arith.constant dense<0.000000e+00> : vector<8xf32>
    %4 = vector.multi_reduction <add>, %1, %cst [1] : vector<8x32xf32> to vector<8xf32>
    %5 = vector.shape_cast %4 : vector<8xf32> to vector<8x1xf32>
    %cst_6 = arith.constant 3.200000e+01 : f32
    %6 = vector.broadcast %cst_6 : f32 to vector<8x1xf32>
    %7 = arith.divf %5, %6 : vector<8x1xf32>
    %8 = vector.broadcast %7 : vector<8x1xf32> to vector<8x32xf32>
    %9 = arith.subf %1, %8 : vector<8x32xf32>
    %10 = vector.broadcast %7 : vector<8x1xf32> to vector<8x32xf32>
    %11 = arith.subf %1, %10 : vector<8x32xf32>
    %12 = arith.mulf %9, %11 : vector<8x32xf32>
    %cst_7 = arith.constant dense<0.000000e+00> : vector<8xf32>
    %13 = vector.multi_reduction <add>, %12, %cst_7 [1] : vector<8x32xf32> to vector<8xf32>
    %14 = vector.shape_cast %13 : vector<8xf32> to vector<8x1xf32>
    %cst_8 = arith.constant 3.200000e+01 : f32
    %15 = vector.broadcast %cst_8 : f32 to vector<8x1xf32>
    %16 = arith.divf %14, %15 : vector<8x1xf32>
    %17 = vector.broadcast %7 : vector<8x1xf32> to vector<8x32xf32>
    %18 = arith.subf %1, %17 : vector<8x32xf32>
    %cst_9 = arith.constant 9.99999974E-6 : f32
    %19 = vector.broadcast %cst_9 : f32 to vector<8x1xf32>
    %20 = arith.addf %16, %19 : vector<8x1xf32>
    %21 = math.rsqrt %20 : vector<8x1xf32>
    %22 = vector.broadcast %21 : vector<8x1xf32> to vector<8x32xf32>
    %23 = arith.mulf %18, %22 : vector<8x32xf32>
    %24 = vector.broadcast %2 : vector<1x32xf32> to vector<8x32xf32>
    %25 = arith.mulf %23, %24 : vector<8x32xf32>
    %26 = vector.broadcast %3 : vector<1x32xf32> to vector<8x32xf32>
    %27 = arith.addf %25, %26 : vector<8x32xf32>
    %28 = arith.truncf %27 : vector<8x32xf32> to vector<8x32xbf16>
    %29 = vector.shape_cast %28 : vector<8x32xbf16> to vector<1x8x32xbf16>
    %30 = vector.shape_cast %29 : vector<1x8x32xbf16> to vector<1x8x32xbf16>
    %31 = vector.broadcast %30 : vector<1x8x32xbf16> to vector<4x8x32xbf16>
    %c0_10 = arith.constant 0 : index
    %c0_11 = arith.constant 0 : index
    %c0_12 = arith.constant 0 : index
    %32 = vector.load %arg5[%c0_10, %c0_11, %c0_12] : memref<4x32x8xbf16, #tpu.memory_space<vmem>>, vector<4x32x8xbf16>
    "tpu.trace_start"() <{level = 10 : i32, message = "hqc,hcd->hqd"}> : () -> ()
    %cst_13 = arith.constant dense<0.000000e+00> : vector<4x8x8xf32>
    %33 = tpu.matmul %31, %32, %cst_13 {dimension_numbers = #tpu.dot_dimension_numbers<[2], [1], [1], [2], [0, 0, 0, 1, 1, 2], [0], [0]>} : vector<4x8x32xbf16>, vector<4x32x8xbf16>, vector<4x8x8xf32> -> vector<4x8x8xf32>
    "tpu.trace_stop"() : () -> ()
    %34 = arith.truncf %33 : vector<4x8x8xf32> to vector<4x8x8xbf16>
    %c0_14 = arith.constant 0 : index
    %c0_15 = arith.constant 0 : index
    %c0_16 = arith.constant 0 : index
    %35 = vector.load %arg6[%c0_14, %c0_15, %c0_16] : memref<4x8x32xbf16, #tpu.memory_space<vmem>>, vector<4x8x32xbf16>
    "tpu.trace_start"() <{level = 10 : i32, message = "hdc,hqc->hdq"}> : () -> ()
    %cst_17 = arith.constant dense<0.000000e+00> : vector<4x8x8xf32>
    %36 = tpu.matmul %35, %31, %cst_17 {dimension_numbers = #tpu.dot_dimension_numbers<[2], [2], [1], [1], [0, 0, 0, 1, 1, 1], [0], [0]>} : vector<4x8x32xbf16>, vector<4x8x32xbf16>, vector<4x8x8xf32> -> vector<4x8x8xf32>
    "tpu.trace_stop"() : () -> ()
    %37 = arith.truncf %36 : vector<4x8x8xf32> to vector<4x8x8xbf16>
    %c0_18 = arith.constant 0 : index
    %c0_19 = arith.constant 0 : index
    %c0_20 = arith.constant 0 : index
    %38 = vector.load %arg7[%c0_18, %c0_19, %c0_20] : memref<4x32x8xbf16, #tpu.memory_space<vmem>>, vector<4x32x8xbf16>
    "tpu.trace_start"() <{level = 10 : i32, message = "hqc,hcd->hqd"}> : () -> ()
    %cst_21 = arith.constant dense<0.000000e+00> : vector<4x8x8xf32>
    %39 = tpu.matmul %31, %38, %cst_21 {dimension_numbers = #tpu.dot_dimension_numbers<[2], [1], [1], [2], [0, 0, 0, 1, 1, 2], [0], [0]>} : vector<4x8x32xbf16>, vector<4x32x8xbf16>, vector<4x8x8xf32> -> vector<4x8x8xf32>
    "tpu.trace_stop"() : () -> ()
    %40 = arith.truncf %39 : vector<4x8x8xf32> to vector<4x8x8xbf16>
    %41 = arith.index_cast %arg1 : i32 to index
    %c0_22 = arith.constant 0 : index
    %c0_23 = arith.constant 0 : index
    %c0_24 = arith.constant 0 : index
    %42 = vector.load %arg17[%41, %c0_22, %c0_23, %c0_24] : memref<2x4x8x8xbf16, #tpu.memory_space<vmem>>, vector<1x4x8x8xbf16>
    %43 = vector.shape_cast %42 : vector<1x4x8x8xbf16> to vector<4x8x8xbf16>
    %44 = vector.shape_cast %37 : vector<4x8x8xbf16> to vector<1x4x8x8xbf16>
    tpu.vector_store %arg17[%41, %c0_22, %c0_23, %c0_24], %44 {strides = array<i32>} : memref<2x4x8x8xbf16, #tpu.memory_space<vmem>>, vector<1x4x8x8xbf16>,
    %45 = arith.index_cast %arg1 : i32 to index
    %c0_25 = arith.constant 0 : index
    %c0_26 = arith.constant 0 : index
    %c0_27 = arith.constant 0 : index
    %46 = vector.load %arg18[%45, %c0_25, %c0_26, %c0_27] : memref<2x4x8x8xbf16, #tpu.memory_space<vmem>>, vector<1x4x8x8xbf16>
    %47 = vector.shape_cast %46 : vector<1x4x8x8xbf16> to vector<4x8x8xbf16>
    %48 = vector.shape_cast %40 : vector<4x8x8xbf16> to vector<1x4x8x8xbf16>
    tpu.vector_store %arg18[%45, %c0_25, %c0_26, %c0_27], %48 {strides = array<i32>} : memref<2x4x8x8xbf16, #tpu.memory_space<vmem>>, vector<1x4x8x8xbf16>,
    %c8_i32 = arith.constant 8 : i32
    %49 = arith.muli %arg1, %c8_i32 : i32
    %50 = tpu.iota {dimensions = array<i32: 0>} : vector<8x8xi32>
    %51 = vector.broadcast %49 : i32 to vector<8x8xi32>
    %52 = arith.addi %51, %50 : vector<8x8xi32>
    %cst_28 = arith.constant 0xFF800000 : f32
    %53 = vector.broadcast %cst_28 : f32 to vector<4x8x1xf32>
    %cst_29 = arith.constant 0.000000e+00 : f32
    %54 = vector.broadcast %cst_29 : f32 to vector<4x8x1xf32>
    %cst_30 = arith.constant 0.000000e+00 : f32
    %55 = vector.broadcast %cst_30 : f32 to vector<4x8x8xf32>
    %c1_i32 = arith.constant 1 : i32
    %56 = arith.addi %arg1, %c1_i32 : i32
    %c0_i32 = arith.constant 0 : i32
    %57 = arith.subi %56, %c0_i32 : i32
    %58 = arith.addi %c0_i32, %57 : i32
    %c1_i32_31 = arith.constant 1 : i32
    %59:3 = scf.for %arg19 = %c0_i32 to %58 step %c1_i32_31 iter_args(%arg20 = %53, %arg21 = %54, %arg22 = %55) -> (vector<4x8x1xf32>, vector<4x8x1xf32>, vector<4x8x8xf32>)  : i32 {
      %115 = arith.index_cast %arg19 : i32 to index
      %c0_62 = arith.constant 0 : index
      %c0_63 = arith.constant 0 : index
      %c0_64 = arith.constant 0 : index
      %116 = vector.load %arg17[%115, %c0_62, %c0_63, %c0_64] : memref<2x4x8x8xbf16, #tpu.memory_space<vmem>>, vector<1x4x8x8xbf16>
      %117 = vector.shape_cast %116 : vector<1x4x8x8xbf16> to vector<4x8x8xbf16>
      %118 = arith.index_cast %arg19 : i32 to index
      %c0_65 = arith.constant 0 : index
      %c0_66 = arith.constant 0 : index
      %c0_67 = arith.constant 0 : index
      %119 = vector.load %arg18[%118, %c0_65, %c0_66, %c0_67] : memref<2x4x8x8xbf16, #tpu.memory_space<vmem>>, vector<1x4x8x8xbf16>
      %120 = vector.shape_cast %119 : vector<1x4x8x8xbf16> to vector<4x8x8xbf16>
      "tpu.trace_start"() <{level = 10 : i32, message = "hqd,hdk->hqk"}> : () -> ()
      %cst_68 = arith.constant dense<0.000000e+00> : vector<4x8x8xf32>
      %121 = tpu.matmul %34, %117, %cst_68 {dimension_numbers = #tpu.dot_dimension_numbers<[2], [1], [1], [2], [0, 0, 0, 1, 1, 2], [0], [0]>} : vector<4x8x8xbf16>, vector<4x8x8xbf16>, vector<4x8x8xf32> -> vector<4x8x8xf32>
      "tpu.trace_stop"() : () -> ()
      %c8_i32_69 = arith.constant 8 : i32
      %122 = arith.muli %arg19, %c8_i32_69 : i32
      %123 = tpu.iota {dimensions = array<i32: 1>} : vector<8x8xi32>
      %124 = vector.broadcast %122 : i32 to vector<8x8xi32>
      %125 = arith.addi %124, %123 : vector<8x8xi32>
      %126 = arith.cmpi sge, %52, %125 : vector<8x8xi32>
      %127 = vector.shape_cast %126 : vector<8x8xi1> to vector<1x8x8xi1>
      %cst_70 = arith.constant -1.000000e+30 : f32
      %128 = vector.shape_cast %127 : vector<1x8x8xi1> to vector<1x8x8xi1>
      %129 = vector.broadcast %128 : vector<1x8x8xi1> to vector<4x8x8xi1>
      %130 = vector.broadcast %cst_70 : f32 to vector<4x8x8xf32>
      %131 = arith.select %129, %121, %130 : vector<4x8x8xi1>, vector<4x8x8xf32>
      %cst_71 = arith.constant dense<0xFF800000> : vector<4x8xf32>
      %132 = vector.multi_reduction <maximumf>, %131, %cst_71 [2] : vector<4x8x8xf32> to vector<4x8xf32>
      %133 = vector.shape_cast %132 : vector<4x8xf32> to vector<4x8x1xf32>
      %134 = arith.maximumf %arg20, %133 : vector<4x8x1xf32>
      %135 = arith.subf %arg20, %134 : vector<4x8x1xf32>
      %136 = math.exp %135 : vector<4x8x1xf32>
      %137 = vector.broadcast %134 : vector<4x8x1xf32> to vector<4x8x8xf32>
      %138 = arith.subf %131, %137 : vector<4x8x8xf32>
      %139 = math.exp %138 : vector<4x8x8xf32>
      %140 = arith.mulf %136, %arg21 : vector<4x8x1xf32>
      %cst_72 = arith.constant dense<0.000000e+00> : vector<4x8xf32>
      %141 = vector.multi_reduction <add>, %139, %cst_72 [2] : vector<4x8x8xf32> to vector<4x8xf32>
      %142 = vector.shape_cast %141 : vector<4x8xf32> to vector<4x8x1xf32>
      %143 = arith.addf %140, %142 : vector<4x8x1xf32>
      %144 = vector.broadcast %136 : vector<4x8x1xf32> to vector<4x8x8xf32>
      %145 = arith.mulf %144, %arg22 : vector<4x8x8xf32>
      %146 = arith.truncf %139 : vector<4x8x8xf32> to vector<4x8x8xbf16>
      "tpu.trace_start"() <{level = 10 : i32, message = "hqk,hkd->hqd"}> : () -> ()
      %cst_73 = arith.constant dense<0.000000e+00> : vector<4x8x8xf32>
      %147 = tpu.matmul %146, %120, %cst_73 {dimension_numbers = #tpu.dot_dimension_numbers<[2], [1], [1], [2], [0, 0, 0, 1, 1, 2], [0], [0]>} : vector<4x8x8xbf16>, vector<4x8x8xbf16>, vector<4x8x8xf32> -> vector<4x8x8xf32>
      "tpu.trace_stop"() : () -> ()
      %148 = arith.addf %145, %147 : vector<4x8x8xf32>
      scf.yield %134, %143, %148 : vector<4x8x1xf32>, vector<4x8x1xf32>, vector<4x8x8xf32>
    }
    %60 = tpu.reciprocal %59#1 {approx = true} : vector<4x8x1xf32> -> vector<4x8x1xf32>
    %61 = vector.broadcast %60 : vector<4x8x1xf32> to vector<4x8x8xf32>
    %62 = arith.mulf %59#2, %61 : vector<4x8x8xf32>
    %63 = arith.truncf %62 : vector<4x8x8xf32> to vector<4x8x8xbf16>
    %c0_32 = arith.constant 0 : index
    %c0_33 = arith.constant 0 : index
    %c0_34 = arith.constant 0 : index
    %64 = vector.load %arg8[%c0_32, %c0_33, %c0_34] : memref<4x8x32xbf16, #tpu.memory_space<vmem>>, vector<4x8x32xbf16>
    "tpu.trace_start"() <{level = 10 : i32, message = "hqd,hdc->hqc"}> : () -> ()
    %cst_35 = arith.constant dense<0.000000e+00> : vector<4x8x32xf32>
    %65 = tpu.matmul %63, %64, %cst_35 {dimension_numbers = #tpu.dot_dimension_numbers<[2], [1], [1], [2], [0, 0, 0, 1, 1, 2], [0], [0]>} : vector<4x8x8xbf16>, vector<4x8x32xbf16>, vector<4x8x32xf32> -> vector<4x8x32xf32>
    "tpu.trace_stop"() : () -> ()
    %cst_36 = arith.constant dense<0.000000e+00> : vector<8x32xf32>
    %66 = vector.multi_reduction <add>, %65, %cst_36 [0] : vector<4x8x32xf32> to vector<8x32xf32>
    %c0_37 = arith.constant 0 : index
    %c0_38 = arith.constant 0 : index
    %67 = vector.load %arg9[%c0_37, %c0_38] : memref<1x32xf32, #tpu.memory_space<vmem>>, vector<1x32xf32>
    %68 = vector.broadcast %67 : vector<1x32xf32> to vector<8x32xf32>
    %69 = arith.addf %66, %68 : vector<8x32xf32>
    %70 = arith.addf %1, %69 : vector<8x32xf32>
    %c0_39 = arith.constant 0 : index
    %c0_40 = arith.constant 0 : index
    %71 = vector.load %arg10[%c0_39, %c0_40] : memref<1x32xf32, #tpu.memory_space<vmem>>, vector<1x32xf32>
    %c0_41 = arith.constant 0 : index
    %c0_42 = arith.constant 0 : index
    %72 = vector.load %arg11[%c0_41, %c0_42] : memref<1x32xf32, #tpu.memory_space<vmem>>, vector<1x32xf32>
    %cst_43 = arith.constant dense<0.000000e+00> : vector<8xf32>
    %73 = vector.multi_reduction <add>, %70, %cst_43 [1] : vector<8x32xf32> to vector<8xf32>
    %74 = vector.shape_cast %73 : vector<8xf32> to vector<8x1xf32>
    %cst_44 = arith.constant 3.200000e+01 : f32
    %75 = vector.broadcast %cst_44 : f32 to vector<8x1xf32>
    %76 = arith.divf %74, %75 : vector<8x1xf32>
    %77 = vector.broadcast %76 : vector<8x1xf32> to vector<8x32xf32>
    %78 = arith.subf %70, %77 : vector<8x32xf32>
    %79 = vector.broadcast %76 : vector<8x1xf32> to vector<8x32xf32>
    %80 = arith.subf %70, %79 : vector<8x32xf32>
    %81 = arith.mulf %78, %80 : vector<8x32xf32>
    %cst_45 = arith.constant dense<0.000000e+00> : vector<8xf32>
    %82 = vector.multi_reduction <add>, %81, %cst_45 [1] : vector<8x32xf32> to vector<8xf32>
    %83 = vector.shape_cast %82 : vector<8xf32> to vector<8x1xf32>
    %cst_46 = arith.constant 3.200000e+01 : f32
    %84 = vector.broadcast %cst_46 : f32 to vector<8x1xf32>
    %85 = arith.divf %83, %84 : vector<8x1xf32>
    %86 = vector.broadcast %76 : vector<8x1xf32> to vector<8x32xf32>
    %87 = arith.subf %70, %86 : vector<8x32xf32>
    %cst_47 = arith.constant 9.99999974E-6 : f32
    %88 = vector.broadcast %cst_47 : f32 to vector<8x1xf32>
    %89 = arith.addf %85, %88 : vector<8x1xf32>
    %90 = math.rsqrt %89 : vector<8x1xf32>
    %91 = vector.broadcast %90 : vector<8x1xf32> to vector<8x32xf32>
    %92 = arith.mulf %87, %91 : vector<8x32xf32>
    %93 = vector.broadcast %71 : vector<1x32xf32> to vector<8x32xf32>
    %94 = arith.mulf %92, %93 : vector<8x32xf32>
    %95 = vector.broadcast %72 : vector<1x32xf32> to vector<8x32xf32>
    %96 = arith.addf %94, %95 : vector<8x32xf32>
    %97 = arith.truncf %96 : vector<8x32xf32> to vector<8x32xbf16>
    %c0_48 = arith.constant 0 : index
    %c0_49 = arith.constant 0 : index
    %98 = vector.load %arg12[%c0_48, %c0_49] : memref<32x128xbf16, #tpu.memory_space<vmem>>, vector<32x128xbf16>
    %cst_50 = arith.constant dense<0.000000e+00> : vector<8x128xf32>
    %99 = tpu.matmul %97, %98, %cst_50 {dimension_numbers = #tpu.dot_dimension_numbers<[1], [0], [0], [1], [0, 0, 1, 1], [], []>} : vector<8x32xbf16>, vector<32x128xbf16>, vector<8x128xf32> -> vector<8x128xf32>
    %c0_51 = arith.constant 0 : index
    %c0_52 = arith.constant 0 : index
    %100 = vector.load %arg13[%c0_51, %c0_52] : memref<1x128xf32, #tpu.memory_space<vmem>>, vector<1x128xf32>
    %101 = vector.broadcast %100 : vector<1x128xf32> to vector<8x128xf32>
    %102 = arith.addf %99, %101 : vector<8x128xf32>
    %cst_53 = arith.constant 0.000000e+00 : f32
    %103 = vector.broadcast %cst_53 : f32 to vector<8x128xf32>
    %104 = arith.maximumf %102, %103 : vector<8x128xf32>
    %105 = arith.truncf %104 : vector<8x128xf32> to vector<8x128xbf16>
    %c0_54 = arith.constant 0 : index
    %c0_55 = arith.constant 0 : index
    %106 = vector.load %arg14[%c0_54, %c0_55] : memref<128x32xbf16, #tpu.memory_space<vmem>>, vector<128x32xbf16>
    %cst_56 = arith.constant dense<0.000000e+00> : vector<8x32xf32>
    %107 = tpu.matmul %105, %106, %cst_56 {dimension_numbers = #tpu.dot_dimension_numbers<[1], [0], [0], [1], [0, 0, 1, 1], [], []>} : vector<8x128xbf16>, vector<128x32xbf16>, vector<8x32xf32> -> vector<8x32xf32>
    %c0_57 = arith.constant 0 : index
    %c0_58 = arith.constant 0 : index
    %108 = vector.load %arg15[%c0_57, %c0_58] : memref<1x32xf32, #tpu.memory_space<vmem>>, vector<1x32xf32>
    %109 = vector.broadcast %108 : vector<1x32xf32> to vector<8x32xf32>
    %110 = arith.addf %107, %109 : vector<8x32xf32>
    %111 = arith.addf %70, %110 : vector<8x32xf32>
    %c0_59 = arith.constant 0 : index
    %c0_60 = arith.constant 0 : index
    %c0_61 = arith.constant 0 : index
    %112 = vector.load %arg16[%c0_59, %c0_60, %c0_61] : memref<1x8x32xf32, #tpu.memory_space<vmem>>, vector<1x8x32xf32>
    %113 = vector.shape_cast %112 : vector<1x8x32xf32> to vector<8x32xf32>
    %114 = vector.shape_cast %111 : vector<8x32xf32> to vector<1x8x32xf32>
    tpu.vector_store %arg16[%c0_59, %c0_60, %c0_61], %114 {strides = array<i32>} : memref<1x8x32xf32, #tpu.memory_space<vmem>>, vector<1x8x32xf32>,
    return
  }
  func.func @transform_0(%arg0: i32, %arg1: i32) -> (i32, i32, i32) {
    %c0_i32 = arith.constant 0 : i32
    %c0_i32_0 = arith.constant 0 : i32
    return %arg0, %arg1, %c0_i32 : i32, i32, i32
  }
  func.func @transform_1(%arg0: i32, %arg1: i32) -> (i32, i32) {
    %c0_i32 = arith.constant 0 : i32
    %c0_i32_0 = arith.constant 0 : i32
    %c0_i32_1 = arith.constant 0 : i32
    return %c0_i32, %c0_i32_0 : i32, i32
  }
  func.func @transform_2(%arg0: i32, %arg1: i32) -> (i32, i32) {
    %c0_i32 = arith.constant 0 : i32
    %c0_i32_0 = arith.constant 0 : i32
    %c0_i32_1 = arith.constant 0 : i32
    return %c0_i32, %c0_i32_0 : i32, i32
  }
  func.func @transform_3(%arg0: i32, %arg1: i32) -> (i32, i32, i32) {
    %c0_i32 = arith.constant 0 : i32
    %c0_i32_0 = arith.constant 0 : i32
    %c0_i32_1 = arith.constant 0 : i32
    %c0_i32_2 = arith.constant 0 : i32
    return %c0_i32, %c0_i32_0, %c0_i32_1 : i32, i32, i32
  }
  func.func @transform_4(%arg0: i32, %arg1: i32) -> (i32, i32, i32) {
    %c0_i32 = arith.constant 0 : i32
    %c0_i32_0 = arith.constant 0 : i32
    %c0_i32_1 = arith.constant 0 : i32
    %c0_i32_2 = arith.constant 0 : i32
    return %c0_i32, %c0_i32_0, %c0_i32_1 : i32, i32, i32
  }
  func.func @transform_5(%arg0: i32, %arg1: i32) -> (i32, i32, i32) {
    %c0_i32 = arith.constant 0 : i32
    %c0_i32_0 = arith.constant 0 : i32
    %c0_i32_1 = arith.constant 0 : i32
    %c0_i32_2 = arith.constant 0 : i32
    return %c0_i32, %c0_i32_0, %c0_i32_1 : i32, i32, i32
  }
  func.func @transform_6(%arg0: i32, %arg1: i32) -> (i32, i32, i32) {
    %c0_i32 = arith.constant 0 : i32
    %c0_i32_0 = arith.constant 0 : i32
    %c0_i32_1 = arith.constant 0 : i32
    %c0_i32_2 = arith.constant 0 : i32
    return %c0_i32, %c0_i32_0, %c0_i32_1 : i32, i32, i32
  }
  func.func @transform_7(%arg0: i32, %arg1: i32) -> (i32, i32) {
    %c0_i32 = arith.constant 0 : i32
    %c0_i32_0 = arith.constant 0 : i32
    %c0_i32_1 = arith.constant 0 : i32
    return %c0_i32, %c0_i32_0 : i32, i32
  }
  func.func @transform_8(%arg0: i32, %arg1: i32) -> (i32, i32) {
    %c0_i32 = arith.constant 0 : i32
    %c0_i32_0 = arith.constant 0 : i32
    %c0_i32_1 = arith.constant 0 : i32
    return %c0_i32, %c0_i32_0 : i32, i32
  }
  func.func @transform_9(%arg0: i32, %arg1: i32) -> (i32, i32) {
    %c0_i32 = arith.constant 0 : i32
    %c0_i32_0 = arith.constant 0 : i32
    %c0_i32_1 = arith.constant 0 : i32
    return %c0_i32, %c0_i32_0 : i32, i32
  }
  func.func @transform_10(%arg0: i32, %arg1: i32) -> (i32, i32) {
    %c0_i32 = arith.constant 0 : i32
    %c0_i32_0 = arith.constant 0 : i32
    %c0_i32_1 = arith.constant 0 : i32
    return %c0_i32, %c0_i32_0 : i32, i32
  }
  func.func @transform_11(%arg0: i32, %arg1: i32) -> (i32, i32) {
    %c0_i32 = arith.constant 0 : i32
    %c0_i32_0 = arith.constant 0 : i32
    %c0_i32_1 = arith.constant 0 : i32
    return %c0_i32, %c0_i32_0 : i32, i32
  }
  func.func @transform_12(%arg0: i32, %arg1: i32) -> (i32, i32) {
    %c0_i32 = arith.constant 0 : i32
    %c0_i32_0 = arith.constant 0 : i32
    %c0_i32_1 = arith.constant 0 : i32
    return %c0_i32, %c0_i32_0 : i32, i32
  }
  func.func @transform_13(%arg0: i32, %arg1: i32) -> (i32, i32) {
    %c0_i32 = arith.constant 0 : i32
    %c0_i32_0 = arith.constant 0 : i32
    %c0_i32_1 = arith.constant 0 : i32
    return %c0_i32, %c0_i32_0 : i32, i32
  }
  func.func @transform_14(%arg0: i32, %arg1: i32) -> (i32, i32, i32) {
    %c0_i32 = arith.constant 0 : i32
    %c0_i32_0 = arith.constant 0 : i32
    return %arg0, %arg1, %c0_i32 : i32, i32, i32
  }
}

</mosaic_0001>

<llo_original>
// kernel: tpu_custom_call.1
$region0: #{tpu_custom_call.1}
  #allocation0 [shape = 'u32[]', space=smem, size = 0x4, offset = 0x4, fixed_abs, tag = 'smem constant byte address 0x4 - core index']
  #allocation1 [shape = 'u32[144,128]{1,0:T(1,128)}', space=vmem, size = 0x12000, scoped, tag = 'internal scratch']
  #allocation2 [shape = 'bf16[2,4,8,8]{3,2,1,0:T(8,128)(2,1)}', space=vmem, size = 0x4000, scoped, tag = 'scratch operand']
  #allocation3 [shape = 'bf16[2,4,8,8]{3,2,1,0:T(8,128)(2,1)}', space=vmem, size = 0x4000, scoped, tag = 'scratch operand']
  %s0 = inlined_call_operand.vmem [shape: f32[2,16,32], index: 0, kind: input, shape index: {}]
  %s1 = inlined_call_operand.vmem [shape: f32[1,32], index: 1, kind: input, shape index: {}]
  %s2 = inlined_call_operand.vmem [shape: f32[1,32], index: 2, kind: input, shape index: {}]
  %s3 = inlined_call_operand.vmem [shape: bf16[4,32,8], index: 3, kind: input, shape index: {}]
  %s4 = inlined_call_operand.vmem [shape: bf16[4,8,32], index: 4, kind: input, shape index: {}]
  %s5 = inlined_call_operand.vmem [shape: bf16[4,32,8], index: 5, kind: input, shape index: {}]
  %s6 = inlined_call_operand.vmem [shape: bf16[4,8,32], index: 6, kind: input, shape index: {}]
  %s7 = inlined_call_operand.vmem [shape: f32[1,32], index: 7, kind: input, shape index: {}]
  %s8 = inlined_call_operand.vmem [shape: f32[1,32], index: 8, kind: input, shape index: {}]
  %s9 = inlined_call_operand.vmem [shape: f32[1,32], index: 9, kind: input, shape index: {}]
  %s10 = inlined_call_operand.vmem [shape: bf16[32,128], index: 10, kind: input, shape index: {}]
  %s11 = inlined_call_operand.vmem [shape: f32[1,128], index: 11, kind: input, shape index: {}]
  %s12 = inlined_call_operand.vmem [shape: bf16[128,32], index: 12, kind: input, shape index: {}]
  %s13 = inlined_call_operand.vmem [shape: f32[1,32], index: 13, kind: input, shape index: {}]
  %s14 = inlined_call_operand.hbm [shape: f32[2,16,32], index: 14, kind: output, shape index: {}]
  %s15 = sld [smem:[#allocation0]]
  $region96: #{tpu_custom_call.1} parent=0
    _
  %s17 = ssub.s32 1, %s15
  %s18 = scalar_select 0, %s17, %s15
  $region1: #{tpu_custom_call.1} parent=0
    #allocation4 [shape = 'u8[8192]{0}', space=vmem, size = 0x2000, scoped, tag = 'output window, operand 0']
    #allocation5 [shape = 's32[2]{0}', space=sflag, size = 0x8, scoped, tag = 'scoped memory for tpu_custom_call.1']
    %19 = vsyncpa [#allocation5], 0
    %s20 = scalar_lea.sflag [#allocation5], 1
    %21 = vsyncpa %s20, 0
    loop: start=0, step=1, limit=6
    $region2: #{tpu_custom_call.1} parent=1 // loop_pre_header
      _
    $region3: #{tpu_custom_call.1} parent=1 // loop_header
      %s23 = sphi 0, %s27
      %p24 = scmp.ge.s32.totalorder %s23, 6
      %s30 = sphi 0, %s42
      %s31 = sphi 0, %s38
      %s32 = sphi 0, %s30
      %s33 = sphi 0, %s31
      %s34 = sphi 0, %s32
      %s35 = sphi 0, %s33
      %s47 = sphi 0, %s49
      %s50 = sphi 0, %s47
      %s51 = sphi 0, %s50
      %s67 = sphi 0, %s51
      %s71 = sphi 0, %s71
      %s73 = sphi 0, %s71
      %s74 = sphi 0, %s73
      %s88 = sphi 0, %s74
      %s92 = sphi 0, %s92
      %s94 = sphi 0, %s92
      %s95 = sphi 0, %s94
      %s109 = sphi 0, %s95
      %s113 = sphi 0, %s113
      %s115 = sphi 0, %s113
      %s116 = sphi 0, %s115
      %s130 = sphi 0, %s116
      %s134 = sphi 0, %s134
      %s136 = sphi 0, %s134
      %s137 = sphi 0, %s136
      %s151 = sphi 0, %s137
      %s155 = sphi 0, %s155
      %s157 = sphi 0, %s155
      %s158 = sphi 0, %s157
      %s172 = sphi 0, %s158
      %s176 = sphi 0, %s176
      %s178 = sphi 0, %s176
      %s179 = sphi 0, %s178
      %s193 = sphi 0, %s179
      %s197 = sphi 0, %s197
      %s199 = sphi 0, %s197
      %s200 = sphi 0, %s199
      %s214 = sphi 0, %s200
      %s218 = sphi 0, %s218
      %s220 = sphi 0, %s218
      %s221 = sphi 0, %s220
      %s235 = sphi 0, %s221
      %s239 = sphi 0, %s239
      %s241 = sphi 0, %s239
      %s242 = sphi 0, %s241
      %s256 = sphi 0, %s242
      %s260 = sphi 0, %s260
      %s262 = sphi 0, %s260
      %s263 = sphi 0, %s262
      %s277 = sphi 0, %s263
      %s281 = sphi 0, %s281
      %s283 = sphi 0, %s281
      %s284 = sphi 0, %s283
      %s298 = sphi 0, %s284
      %s302 = sphi 0, %s302
      %s304 = sphi 0, %s302
      %s305 = sphi 0, %s304
      %s319 = sphi 0, %s305
      %s323 = sphi 0, %s323
      %s325 = sphi 0, %s323
      %s326 = sphi 0, %s325
      %s340 = sphi 0, %s326
      %s348 = sphi 0, %s350
      %s351 = sphi 0, %s348
      %s352 = sphi 0, %s351
      %s368 = sphi 0, %s352
    $region4: #{tpu_custom_call.1} parent=1 // loop_header_branch
      %26 = sbr.rel (%p24) target = $region8
    $region5: #{tpu_custom_call.1} parent=1 // loop_body
      %s28 = ssub.s32 %s23, 1
      %s29 = ssub.s32 %s23, 2
      %s36 = sadd.s32 1, %s31
      %p37 = scmp.ge.s32.totalorder %s36, 2
      %s38 = scalar_select %p37, 0, %s36
      %s39 = sadd.s32 1, %s30
      %s40 = scalar_select %p37, %s39, %s30
      %p41 = scmp.ge.s32.totalorder %s40, 2
      %s42 = scalar_select %p41, 0, %s40
      %s43 = ssub.s32 %s30, %s42
      %s44 = ssub.s32 %s31, %s38
      %s45 = sor.u32 %s43, %s44
      %p46 = scmp.eq.s32.totalorder %s45, 0
      %s48 = sadd.s32 %s47, 1
      %s49 = scalar_select %p46, %s47, %s48
      %p52 = pneg %p46
      %p53 = scmp.eq.s32.totalorder %s23, 3
      %p54 = por %p52, %p53
      %p55 = scmp.ne.s32.totalorder %s47, %s50
      %p56 = scmp.eq.s32.totalorder %s23, 0
      %p57 = por %p55, %p56
      %p58 = scmp.ne.s32.totalorder %s47, %s50
      %p59 = scmp.eq.s32.totalorder %s28, 3
      %p60 = por %p58, %p59
      %p61 = scmp.ne.s32.totalorder %s50, %s51
      %p62 = scmp.eq.s32.totalorder %s28, 0
      %p63 = por %p61, %p62
      %p64 = scmp.ne.s32.totalorder %s50, %s51
      %p65 = scmp.eq.s32.totalorder %s29, 3
      %p66 = por %p64, %p65
      %p68 = scmp.ne.s32.totalorder %s51, %s67
      %p69 = scmp.eq.s32.totalorder %s29, 0
      %p70 = por %p68, %p69
      %s72 = sadd.s32 %s71, 1
      %p75 = scmp.eq.s32.totalorder %s23, 3
      %p76 = scmp.ne.s32.totalorder %s71, %s73
      %p77 = scmp.eq.s32.totalorder %s23, 0
      %p78 = por %p76, %p77
      %p79 = scmp.ne.s32.totalorder %s71, %s73
      %p80 = scmp.eq.s32.totalorder %s28, 3
      %p81 = por %p79, %p80
      %p82 = scmp.ne.s32.totalorder %s73, %s74
      %p83 = scmp.eq.s32.totalorder %s28, 0
      %p84 = por %p82, %p83
      %p85 = scmp.ne.s32.totalorder %s73, %s74
      %p86 = scmp.eq.s32.totalorder %s29, 3
      %p87 = por %p85, %p86
      %p89 = scmp.ne.s32.totalorder %s74, %s88
      %p90 = scmp.eq.s32.totalorder %s29, 0
      %p91 = por %p89, %p90
      %s93 = sadd.s32 %s92, 1
      %p96 = scmp.eq.s32.totalorder %s23, 3
      %p97 = scmp.ne.s32.totalorder %s92, %s94
      %p98 = scmp.eq.s32.totalorder %s23, 0
      %p99 = por %p97, %p98
      %p100 = scmp.ne.s32.totalorder %s92, %s94
      %p101 = scmp.eq.s32.totalorder %s28, 3
      %p102 = por %p100, %p101
      %p103 = scmp.ne.s32.totalorder %s94, %s95
      %p104 = scmp.eq.s32.totalorder %s28, 0
      %p105 = por %p103, %p104
      %p106 = scmp.ne.s32.totalorder %s94, %s95
      %p107 = scmp.eq.s32.totalorder %s29, 3
      %p108 = por %p106, %p107
      %p110 = scmp.ne.s32.totalorder %s95, %s109
      %p111 = scmp.eq.s32.totalorder %s29, 0
      %p112 = por %p110, %p111
      %s114 = sadd.s32 %s113, 1
      %p117 = scmp.eq.s32.totalorder %s23, 3
      %p118 = scmp.ne.s32.totalorder %s113, %s115
      %p119 = scmp.eq.s32.totalorder %s23, 0
      %p120 = por %p118, %p119
      %p121 = scmp.ne.s32.totalorder %s113, %s115
      %p122 = scmp.eq.s32.totalorder %s28, 3
      %p123 = por %p121, %p122
      %p124 = scmp.ne.s32.totalorder %s115, %s116
      %p125 = scmp.eq.s32.totalorder %s28, 0
      %p126 = por %p124, %p125
      %p127 = scmp.ne.s32.totalorder %s115, %s116
      %p128 = scmp.eq.s32.totalorder %s29, 3
      %p129 = por %p127, %p128
      %p131 = scmp.ne.s32.totalorder %s116, %s130
      %p132 = scmp.eq.s32.totalorder %s29, 0
      %p133 = por %p131, %p132
      %s135 = sadd.s32 %s134, 1
      %p138 = scmp.eq.s32.totalorder %s23, 3
      %p139 = scmp.ne.s32.totalorder %s134, %s136
      %p140 = scmp.eq.s32.totalorder %s23, 0
      %p141 = por %p139, %p140
      %p142 = scmp.ne.s32.totalorder %s134, %s136
      %p143 = scmp.eq.s32.totalorder %s28, 3
      %p144 = por %p142, %p143
      %p145 = scmp.ne.s32.totalorder %s136, %s137
      %p146 = scmp.eq.s32.totalorder %s28, 0
      %p147 = por %p145, %p146
      %p148 = scmp.ne.s32.totalorder %s136, %s137
      %p149 = scmp.eq.s32.totalorder %s29, 3
      %p150 = por %p148, %p149
      %p152 = scmp.ne.s32.totalorder %s137, %s151
      %p153 = scmp.eq.s32.totalorder %s29, 0
      %p154 = por %p152, %p153
      %s156 = sadd.s32 %s155, 1
      %p159 = scmp.eq.s32.totalorder %s23, 3
      %p160 = scmp.ne.s32.totalorder %s155, %s157
      %p161 = scmp.eq.s32.totalorder %s23, 0
      %p162 = por %p160, %p161
      %p163 = scmp.ne.s32.totalorder %s155, %s157
      %p164 = scmp.eq.s32.totalorder %s28, 3
      %p165 = por %p163, %p164
      %p166 = scmp.ne.s32.totalorder %s157, %s158
      %p167 = scmp.eq.s32.totalorder %s28, 0
      %p168 = por %p166, %p167
      %p169 = scmp.ne.s32.totalorder %s157, %s158
      %p170 = scmp.eq.s32.totalorder %s29, 3
      %p171 = por %p169, %p170
      %p173 = scmp.ne.s32.totalorder %s158, %s172
      %p174 = scmp.eq.s32.totalorder %s29, 0
      %p175 = por %p173, %p174
      %s177 = sadd.s32 %s176, 1
      %p180 = scmp.eq.s32.totalorder %s23, 3
      %p181 = scmp.ne.s32.totalorder %s176, %s178
      %p182 = scmp.eq.s32.totalorder %s23, 0
      %p183 = por %p181, %p182
      %p184 = scmp.ne.s32.totalorder %s176, %s178
      %p185 = scmp.eq.s32.totalorder %s28, 3
      %p186 = por %p184, %p185
      %p187 = scmp.ne.s32.totalorder %s178, %s179
      %p188 = scmp.eq.s32.totalorder %s28, 0
      %p189 = por %p187, %p188
      %p190 = scmp.ne.s32.totalorder %s178, %s179
      %p191 = scmp.eq.s32.totalorder %s29, 3
      %p192 = por %p190, %p191
      %p194 = scmp.ne.s32.totalorder %s179, %s193
      %p195 = scmp.eq.s32.totalorder %s29, 0
      %p196 = por %p194, %p195
      %s198 = sadd.s32 %s197, 1
      %p201 = scmp.eq.s32.totalorder %s23, 3
      %p202 = scmp.ne.s32.totalorder %s197, %s199
      %p203 = scmp.eq.s32.totalorder %s23, 0
      %p204 = por %p202, %p203
      %p205 = scmp.ne.s32.totalorder %s197, %s199
      %p206 = scmp.eq.s32.totalorder %s28, 3
      %p207 = por %p205, %p206
      %p208 = scmp.ne.s32.totalorder %s199, %s200
      %p209 = scmp.eq.s32.totalorder %s28, 0
      %p210 = por %p208, %p209
      %p211 = scmp.ne.s32.totalorder %s199, %s200
      %p212 = scmp.eq.s32.totalorder %s29, 3
      %p213 = por %p211, %p212
      %p215 = scmp.ne.s32.totalorder %s200, %s214
      %p216 = scmp.eq.s32.totalorder %s29, 0
      %p217 = por %p215, %p216
      %s219 = sadd.s32 %s218, 1
      %p222 = scmp.eq.s32.totalorder %s23, 3
      %p223 = scmp.ne.s32.totalorder %s218, %s220
      %p224 = scmp.eq.s32.totalorder %s23, 0
      %p225 = por %p223, %p224
      %p226 = scmp.ne.s32.totalorder %s218, %s220
      %p227 = scmp.eq.s32.totalorder %s28, 3
      %p228 = por %p226, %p227
      %p229 = scmp.ne.s32.totalorder %s220, %s221
      %p230 = scmp.eq.s32.totalorder %s28, 0
      %p231 = por %p229, %p230
      %p232 = scmp.ne.s32.totalorder %s220, %s221
      %p233 = scmp.eq.s32.totalorder %s29, 3
      %p234 = por %p232, %p233
      %p236 = scmp.ne.s32.totalorder %s221, %s235
      %p237 = scmp.eq.s32.totalorder %s29, 0
      %p238 = por %p236, %p237
      %s240 = sadd.s32 %s239, 1
      %p243 = scmp.eq.s32.totalorder %s23, 3
      %p244 = scmp.ne.s32.totalorder %s239, %s241
      %p245 = scmp.eq.s32.totalorder %s23, 0
      %p246 = por %p244, %p245
      %p247 = scmp.ne.s32.totalorder %s239, %s241
      %p248 = scmp.eq.s32.totalorder %s28, 3
      %p249 = por %p247, %p248
      %p250 = scmp.ne.s32.totalorder %s241, %s242
      %p251 = scmp.eq.s32.totalorder %s28, 0
      %p252 = por %p250, %p251
      %p253 = scmp.ne.s32.totalorder %s241, %s242
      %p254 = scmp.eq.s32.totalorder %s29, 3
      %p255 = por %p253, %p254
      %p257 = scmp.ne.s32.totalorder %s242, %s256
      %p258 = scmp.eq.s32.totalorder %s29, 0
      %p259 = por %p257, %p258
      %s261 = sadd.s32 %s260, 1
      %p264 = scmp.eq.s32.totalorder %s23, 3
      %p265 = scmp.ne.s32.totalorder %s260, %s262
      %p266 = scmp.eq.s32.totalorder %s23, 0
      %p267 = por %p265, %p266
      %p268 = scmp.ne.s32.totalorder %s260, %s262
      %p269 = scmp.eq.s32.totalorder %s28, 3
      %p270 = por %p268, %p269
      %p271 = scmp.ne.s32.totalorder %s262, %s263
      %p272 = scmp.eq.s32.totalorder %s28, 0
      %p273 = por %p271, %p272
      %p274 = scmp.ne.s32.totalorder %s262, %s263
      %p275 = scmp.eq.s32.totalorder %s29, 3
      %p276 = por %p274, %p275
      %p278 = scmp.ne.s32.totalorder %s263, %s277
      %p279 = scmp.eq.s32.totalorder %s29, 0
      %p280 = por %p278, %p279
      %s282 = sadd.s32 %s281, 1
      %p285 = scmp.eq.s32.totalorder %s23, 3
      %p286 = scmp.ne.s32.totalorder %s281, %s283
      %p287 = scmp.eq.s32.totalorder %s23, 0
      %p288 = por %p286, %p287
      %p289 = scmp.ne.s32.totalorder %s281, %s283
      %p290 = scmp.eq.s32.totalorder %s28, 3
      %p291 = por %p289, %p290
      %p292 = scmp.ne.s32.totalorder %s283, %s284
      %p293 = scmp.eq.s32.totalorder %s28, 0
      %p294 = por %p292, %p293
      %p295 = scmp.ne.s32.totalorder %s283, %s284
      %p296 = scmp.eq.s32.totalorder %s29, 3
      %p297 = por %p295, %p296
      %p299 = scmp.ne.s32.totalorder %s284, %s298
      %p300 = scmp.eq.s32.totalorder %s29, 0
      %p301 = por %p299, %p300
      %s303 = sadd.s32 %s302, 1
      %p306 = scmp.eq.s32.totalorder %s23, 3
      %p307 = scmp.ne.s32.totalorder %s302, %s304
      %p308 = scmp.eq.s32.totalorder %s23, 0
      %p309 = por %p307, %p308
      %p310 = scmp.ne.s32.totalorder %s302, %s304
      %p311 = scmp.eq.s32.totalorder %s28, 3
      %p312 = por %p310, %p311
      %p313 = scmp.ne.s32.totalorder %s304, %s305
      %p314 = scmp.eq.s32.totalorder %s28, 0
      %p315 = por %p313, %p314
      %p316 = scmp.ne.s32.totalorder %s304, %s305
      %p317 = scmp.eq.s32.totalorder %s29, 3
      %p318 = por %p316, %p317
      %p320 = scmp.ne.s32.totalorder %s305, %s319
      %p321 = scmp.eq.s32.totalorder %s29, 0
      %p322 = por %p320, %p321
      %s324 = sadd.s32 %s323, 1
      %p327 = scmp.eq.s32.totalorder %s23, 3
      %p328 = scmp.ne.s32.totalorder %s323, %s325
      %p329 = scmp.eq.s32.totalorder %s23, 0
      %p330 = por %p328, %p329
      %p331 = scmp.ne.s32.totalorder %s323, %s325
      %p332 = scmp.eq.s32.totalorder %s28, 3
      %p333 = por %p331, %p332
      %p334 = scmp.ne.s32.totalorder %s325, %s326
      %p335 = scmp.eq.s32.totalorder %s28, 0
      %p336 = por %p334, %p335
      %p337 = scmp.ne.s32.totalorder %s325, %s326
      %p338 = scmp.eq.s32.totalorder %s29, 3
      %p339 = por %p337, %p338
      %p341 = scmp.ne.s32.totalorder %s326, %s340
      %p342 = scmp.eq.s32.totalorder %s29, 0
      %p343 = por %p341, %p342
      %s344 = ssub.s32 %s30, %s42
      %s345 = ssub.s32 %s31, %s38
      %s346 = sor.u32 %s344, %s345
      %p347 = scmp.eq.s32.totalorder %s346, 0
      %s349 = sadd.s32 %s348, 1
      %s350 = scalar_select %p347, %s348, %s349
      %p353 = pneg %p347
      %p354 = scmp.eq.s32.totalorder %s23, 3
      %p355 = por %p353, %p354
      %p356 = scmp.ne.s32.totalorder %s348, %s351
      %p357 = scmp.eq.s32.totalorder %s23, 0
      %p358 = por %p356, %p357
      %p359 = scmp.ne.s32.totalorder %s348, %s351
      %p360 = scmp.eq.s32.totalorder %s28, 3
      %p361 = por %p359, %p360
      %p362 = scmp.ne.s32.totalorder %s351, %s352
      %p363 = scmp.eq.s32.totalorder %s28, 0
      %p364 = por %p362, %p363
      %p365 = scmp.ne.s32.totalorder %s351, %s352
      %p366 = scmp.eq.s32.totalorder %s29, 3
      %p367 = por %p365, %p366
      %p369 = scmp.ne.s32.totalorder %s352, %s368
      %p370 = scmp.eq.s32.totalorder %s29, 0
      %p371 = por %p369, %p370
      %p372 = scmp.le.s32.totalorder 1, %s23
      %p373 = scmp.lt.s32.totalorder %s23, 5
      %p374 = pnand %p372, %p373
      %p375 = pneg %p374
      // Predicated region
      $region9: #{tpu_custom_call.1} parent=5 // pred_check
        _
      $region10: #{tpu_custom_call.1} parent=5 // pred_check_branch
        %377 = sbr.rel (%p374) target = $region12
      $region11: #{tpu_custom_call.1} parent=5 // pred_region
        %s378 = ssub.s32 %s23, 1
        // Predicated region
        $region13: #{tpu_custom_call.1} parent=11 // pred_check
          %p379 = pneg %p84
        $region14: #{tpu_custom_call.1} parent=11 // pred_check_branch
          %381 = sbr.rel (%p379) target = $region16
        $region15: #{tpu_custom_call.1} parent=11 // pred_region
          _
        $region16: #{tpu_custom_call.1} parent=11 // pred_fallthru
          _
        // Predicated region
        $region17: #{tpu_custom_call.1} parent=11 // pred_check
          %p382 = pneg %p105
        $region18: #{tpu_custom_call.1} parent=11 // pred_check_branch
          %384 = sbr.rel (%p382) target = $region20
        $region19: #{tpu_custom_call.1} parent=11 // pred_region
          _
        $region20: #{tpu_custom_call.1} parent=11 // pred_fallthru
          _
        // Predicated region
        $region21: #{tpu_custom_call.1} parent=11 // pred_check
          %p385 = pneg %p126
        $region22: #{tpu_custom_call.1} parent=11 // pred_check_branch
          %387 = sbr.rel (%p385) target = $region24
        $region23: #{tpu_custom_call.1} parent=11 // pred_region
          _
        $region24: #{tpu_custom_call.1} parent=11 // pred_fallthru
          _
        // Predicated region
        $region25: #{tpu_custom_call.1} parent=11 // pred_check
          %p388 = pneg %p147
        $region26: #{tpu_custom_call.1} parent=11 // pred_check_branch
          %390 = sbr.rel (%p388) target = $region28
        $region27: #{tpu_custom_call.1} parent=11 // pred_region
          _
        $region28: #{tpu_custom_call.1} parent=11 // pred_fallthru
          _
        // Predicated region
        $region29: #{tpu_custom_call.1} parent=11 // pred_check
          %p391 = pneg %p168
        $region30: #{tpu_custom_call.1} parent=11 // pred_check_branch
          %393 = sbr.rel (%p391) target = $region32
        $region31: #{tpu_custom_call.1} parent=11 // pred_region
          _
        $region32: #{tpu_custom_call.1} parent=11 // pred_fallthru
          _
        // Predicated region
        $region33: #{tpu_custom_call.1} parent=11 // pred_check
          %p394 = pneg %p189
        $region34: #{tpu_custom_call.1} parent=11 // pred_check_branch
          %396 = sbr.rel (%p394) target = $region36
        $region35: #{tpu_custom_call.1} parent=11 // pred_region
          _
        $region36: #{tpu_custom_call.1} parent=11 // pred_fallthru
          _
        // Predicated region
        $region37: #{tpu_custom_call.1} parent=11 // pred_check
          %p397 = pneg %p210
        $region38: #{tpu_custom_call.1} parent=11 // pred_check_branch
          %399 = sbr.rel (%p397) target = $region40
        $region39: #{tpu_custom_call.1} parent=11 // pred_region
          _
        $region40: #{tpu_custom_call.1} parent=11 // pred_fallthru
          _
        // Predicated region
        $region41: #{tpu_custom_call.1} parent=11 // pred_check
          %p400 = pneg %p231
        $region42: #{tpu_custom_call.1} parent=11 // pred_check_branch
          %402 = sbr.rel (%p400) target = $region44
        $region43: #{tpu_custom_call.1} parent=11 // pred_region
          _
        $region44: #{tpu_custom_call.1} parent=11 // pred_fallthru
          _
        // Predicated region
        $region45: #{tpu_custom_call.1} parent=11 // pred_check
          %p403 = pneg %p252
        $region46: #{tpu_custom_call.1} parent=11 // pred_check_branch
          %405 = sbr.rel (%p403) target = $region48
        $region47: #{tpu_custom_call.1} parent=11 // pred_region
          _
        $region48: #{tpu_custom_call.1} parent=11 // pred_fallthru
          _
        // Predicated region
        $region49: #{tpu_custom_call.1} parent=11 // pred_check
          %p406 = pneg %p273
        $region50: #{tpu_custom_call.1} parent=11 // pred_check_branch
          %408 = sbr.rel (%p406) target = $region52
        $region51: #{tpu_custom_call.1} parent=11 // pred_region
          _
        $region52: #{tpu_custom_call.1} parent=11 // pred_fallthru
          _
        // Predicated region
        $region53: #{tpu_custom_call.1} parent=11 // pred_check
          %p409 = pneg %p294
        $region54: #{tpu_custom_call.1} parent=11 // pred_check_branch
          %411 = sbr.rel (%p409) target = $region56
        $region55: #{tpu_custom_call.1} parent=11 // pred_region
          _
        $region56: #{tpu_custom_call.1} parent=11 // pred_fallthru
          _
        // Predicated region
        $region57: #{tpu_custom_call.1} parent=11 // pred_check
          %p412 = pneg %p315
        $region58: #{tpu_custom_call.1} parent=11 // pred_check_branch
          %414 = sbr.rel (%p412) target = $region60
        $region59: #{tpu_custom_call.1} parent=11 // pred_region
          _
        $region60: #{tpu_custom_call.1} parent=11 // pred_fallthru
          _
        // Predicated region
        $region61: #{tpu_custom_call.1} parent=11 // pred_check
          %p415 = pneg %p336
        $region62: #{tpu_custom_call.1} parent=11 // pred_check_branch
          %417 = sbr.rel (%p415) target = $region64
        $region63: #{tpu_custom_call.1} parent=11 // pred_region
          _
        $region64: #{tpu_custom_call.1} parent=11 // pred_fallthru
          _
      $region12: #{tpu_custom_call.1} parent=5 // pred_fallthru
        _
      %p418 = scmp.lt.s32.totalorder %s23, 4
      // Predicated region
      $region65: #{tpu_custom_call.1} parent=5 // pred_check
        %p419 = pneg %p418
      $region66: #{tpu_custom_call.1} parent=5 // pred_check_branch
        %421 = sbr.rel (%p419) target = $region68
      $region67: #{tpu_custom_call.1} parent=5 // pred_region
        // Predicated region
        $region69: #{tpu_custom_call.1} parent=67 // pred_check
          %p422 = pneg %p57
        $region70: #{tpu_custom_call.1} parent=67 // pred_check_branch
          %424 = sbr.rel (%p422) target = $region72
        $region71: #{tpu_custom_call.1} parent=67 // pred_region
          %p425 = scmp.lt.s32.totalorder %s30, 1
          %s426 = scalar_select %p425, %s30, 1
          %p427 = scmp.lt.s32.totalorder %s31, 1
          %s428 = scalar_select %p427, %s31, 1
          %s429 = smul.addr %s426, 2
          %s430 = sadd.s32 %s428, %s429
          %s431 = smul.addr %s430, 8
          %s432 = scalar_lea.vmem %s0, %s431
        $region72: #{tpu_custom_call.1} parent=67 // pred_fallthru
          _
      $region68: #{tpu_custom_call.1} parent=5 // pred_fallthru
        _
      %p433 = scmp.le.s32.totalorder 1, %s23
      %p434 = scmp.lt.s32.totalorder %s23, 5
      %p435 = pnand %p433, %p434
      %p436 = pneg %p435
      // Predicated region
      $region73: #{tpu_custom_call.1} parent=5 // pred_check
        _
      $region74: #{tpu_custom_call.1} parent=5 // pred_check_branch
        %438 = sbr.rel (%p435) target = $region76
      $region75: #{tpu_custom_call.1} parent=5 // pred_region
        %s439 = ssub.s32 %s23, 1
        %p440 = scmp.lt.s32.totalorder %s32, 1
        %s441 = scalar_select %p440, %s32, 1
        %p442 = scmp.lt.s32.totalorder %s33, 1
        %s443 = scalar_select %p442, %s33, 1
        %s444 = smul.addr %s441, 2
        %s445 = sadd.s32 %s443, %s444
        %s446 = smul.addr %s445, 8
        %s447 = scalar_lea.vmem %s0, %s446
        %p448 = pneg %p63
        %p449 = pneg %p60
        %p450 = pneg %p84
        %p451 = pneg %p81
        %p452 = pneg %p105
        %p453 = pneg %p102
        %p454 = pneg %p126
        %p455 = pneg %p123
        %p456 = pneg %p147
        %p457 = pneg %p144
        %p458 = pneg %p168
        %p459 = pneg %p165
        %p460 = pneg %p189
        %p461 = pneg %p186
        %p462 = pneg %p210
        %p463 = pneg %p207
        %p464 = pneg %p231
        %p465 = pneg %p228
        %p466 = pneg %p252
        %p467 = pneg %p249
        %p468 = pneg %p273
        %p469 = pneg %p270
        %p470 = pneg %p294
        %p471 = pneg %p291
        %p472 = pneg %p315
        %p473 = pneg %p312
        %p474 = pneg %p336
        %p475 = pneg %p333
        %p476 = pneg %p364
        %p477 = pneg %p361
        %s478 = sand.u32 %s351, 1
        %s479 = scalar_lea.sflag [#allocation5], %s478
        %s480 = sand.u32 %s351, 1
        %s481 = smul.addr %s480, 8
        %s482 = scalar_lea.vmem [#allocation4], %s481
        %p483 = scmp.lt.s32.totalorder %s32, 1
        %s484 = scalar_select %p483, %s32, 1
        %p485 = scmp.lt.s32.totalorder %s33, 1
        %s486 = scalar_select %p485, %s33, 1
        %s487 = smul.addr %s484, 2
        %s488 = sadd.s32 %s486, %s487
        %s489 = smul.addr %s488, 8
        %s490 = scalar_lea.vmem %s0, %s489
        %v492 = vld [vmem:[%s490] sm:$0xff]
        %v493 = vld [vmem:[%s1] sm:$0x1]
        %v494 = vld [vmem:[%s2] sm:$0x1]
        %vm495 = vcmask 261120
        %v496 = vsel %vm495, %v492, 0.0
        %497 = vadd.xlane.f32.xlu0 %v496
        %v498 = vpop.xlane.xlu0 %497
        %v499 = vrcp.pop 32.0
        %v500 = vmul.f32 %v498, %v499
        %v501 = vsub.f32 %v492, %v500
        %v502 = vmul.f32 %v501, %v501
        %v503 = vsel %vm495, %v502, 0.0
        %504 = vadd.xlane.f32.xlu0 %v503
        %v505 = vpop.xlane.xlu0 %504
        %v506 = vmul.f32 %v505, %v499
        %v507 = vadd.f32 %v506, 1e-05
        %v508 = vrsqrt.pop %v507
        %v509 = vmul.f32 %v501, %v508
        %v511 = vlaneseq
        %v512 = vshrl.u32 %v511, 7
        %v513 = vsub.s32 0, %v512
        %v514 = vrot.slane %v493, %v513
        %v516 = vmul.f32 %v509, %v514
        %v518 = vlaneseq
        %v519 = vshrl.u32 %v518, 7
        %v520 = vsub.s32 0, %v519
        %v521 = vrot.slane %v494, %v520
        %v523 = vadd.f32 %v516, %v521
        %v524 = vpack.c.bf16 %v523, %v523
        %v525 = vld [vmem:[%s3] sm:$0xf]
        %v526 = vld [vmem:[%s3 + $0x4] sm:$0xf]
        %v527 = vld [vmem:[%s3 + $0x8] sm:$0xf]
        %v528 = vld [vmem:[%s3 + $0xc] sm:$0xf]
        %v529 = vld [vmem:[%s3 + $0x10] sm:$0xf]
        %v530 = vld [vmem:[%s3 + $0x14] sm:$0xf]
        %v531 = vld [vmem:[%s3 + $0x18] sm:$0xf]
        %v532 = vld [vmem:[%s3 + $0x1c] sm:$0xf]
        %v533 = vld [vmem:[%s3 + $0x20] sm:$0xf]
        %v534 = vld [vmem:[%s3 + $0x24] sm:$0xf]
        %v535 = vld [vmem:[%s3 + $0x28] sm:$0xf]
        %v536 = vld [vmem:[%s3 + $0x2c] sm:$0xf]
        %v537 = vld [vmem:[%s3 + $0x30] sm:$0xf]
        %v538 = vld [vmem:[%s3 + $0x34] sm:$0xf]
        %v539 = vld [vmem:[%s3 + $0x38] sm:$0xf]
        %v540 = vld [vmem:[%s3 + $0x3c] sm:$0xf]
        %v545 = vunpack.c.l.b16 %v525
        %v546 = vunpack.c.l.b16 %v526
        %v547 = vunpack.c.l.b16 %v527
        %v548 = vunpack.c.l.b16 %v528
        %v549 = vpack.c.b16 %v546, %v545
        %v550 = vpack.c.b16 %v548, %v547
        %v554 = vsel %vm495, %v524, 0
        %556 = vmatprep.subr.bf16.mxu0 0
        %557 = vmatpush1.bf16.msra.mxu0 %v549
        %558 = vmatprep.subr.bf16.mxu0 0
        %559 = vmatpush1.bf16.msra.mxu0 %v550
        %560 = vmatprep.subr.bf16.mxu0 0
        %561 = vmatpush1.bf16.msra.mxu0 0
        %562 = vmatprep.subr.bf16.mxu0 0
        %563 = vmatpush1.bf16.msra.mxu0 0
        %564 = vmatprep.subr.bf16.mxu0 0
        %565 = vmatpush1.bf16.msra.mxu0 0
        %566 = vmatprep.subr.bf16.mxu0 0
        %567 = vmatpush1.bf16.msra.mxu0 0
        %568 = vmatprep.subr.bf16.mxu0 0
        %569 = vmatpush1.bf16.msra.mxu0 0
        %570 = vmatprep.subr.bf16.mxu0 0
        %571 = vmatpush1.bf16.msra.mxu0 0
        %572 = vmatprep.subr.bf16.mxu0 0
        %573 = vmatpush1.bf16.msra.mxu0 0
        %574 = vmatprep.subr.bf16.mxu0 0
        %575 = vmatpush1.bf16.msra.mxu0 0
        %576 = vmatprep.subr.bf16.mxu0 0
        %577 = vmatpush1.bf16.msra.mxu0 0
        %578 = vmatprep.subr.bf16.mxu0 0
        %579 = vmatpush1.bf16.msra.mxu0 0
        %580 = vmatprep.subr.bf16.mxu0 0
        %581 = vmatpush1.bf16.msra.mxu0 0
        %582 = vmatprep.subr.bf16.mxu0 0
        %583 = vmatpush1.bf16.msra.mxu0 0
        %584 = vmatprep.subr.bf16.mxu0 0
        %585 = vmatpush1.bf16.msra.mxu0 0
        %586 = vmatprep.subr.bf16.mxu0 0
        %587 = vmatpush1.bf16.msra.mxu0 0
        %588 = vmatprep.mubr.bf16.mxu0 0
        %589 = vmatmul.mubr.bf16.gmra.mrb[0].mxu0 %v554
        %v590 = vpop.f32.mrb[0].mxu0
        %v591 = vadd.f32 0.0, %v590
        %v592 = vpop.f32.mrb[0].mxu0
        %v593 = vpop.f32.mrb[0].mxu0
        %v594 = vpop.f32.mrb[0].mxu0
        %595 = vdwg.mxu0
        %v600 = vunpack.c.l.b16 %v529
        %v601 = vunpack.c.l.b16 %v530
        %v602 = vunpack.c.l.b16 %v531
        %v603 = vunpack.c.l.b16 %v532
        %v604 = vpack.c.b16 %v601, %v600
        %v605 = vpack.c.b16 %v603, %v602
        %608 = vmatprep.subr.bf16.mxu0 0
        %609 = vmatpush1.bf16.msra.mxu0 %v604
        %610 = vmatprep.subr.bf16.mxu0 0
        %611 = vmatpush1.bf16.msra.mxu0 %v605
        %612 = vmatprep.subr.bf16.mxu0 0
        %613 = vmatpush1.bf16.msra.mxu0 0
        %614 = vmatprep.subr.bf16.mxu0 0
        %615 = vmatpush1.bf16.msra.mxu0 0
        %616 = vmatprep.subr.bf16.mxu0 0
        %617 = vmatpush1.bf16.msra.mxu0 0
        %618 = vmatprep.subr.bf16.mxu0 0
        %619 = vmatpush1.bf16.msra.mxu0 0
        %620 = vmatprep.subr.bf16.mxu0 0
        %621 = vmatpush1.bf16.msra.mxu0 0
        %622 = vmatprep.subr.bf16.mxu0 0
        %623 = vmatpush1.bf16.msra.mxu0 0
        %624 = vmatprep.subr.bf16.mxu0 0
        %625 = vmatpush1.bf16.msra.mxu0 0
        %626 = vmatprep.subr.bf16.mxu0 0
        %627 = vmatpush1.bf16.msra.mxu0 0
        %628 = vmatprep.subr.bf16.mxu0 0
        %629 = vmatpush1.bf16.msra.mxu0 0
        %630 = vmatprep.subr.bf16.mxu0 0
        %631 = vmatpush1.bf16.msra.mxu0 0
        %632 = vmatprep.subr.bf16.mxu0 0
        %633 = vmatpush1.bf16.msra.mxu0 0
        %634 = vmatprep.subr.bf16.mxu0 0
        %635 = vmatpush1.bf16.msra.mxu0 0
        %636 = vmatprep.subr.bf16.mxu0 0
        %637 = vmatpush1.bf16.msra.mxu0 0
        %638 = vmatprep.subr.bf16.mxu0 0
        %639 = vmatpush1.bf16.msra.mxu0 0
        %640 = vmatprep.mubr.bf16.mxu0 0
        %641 = vmatmul.mubr.bf16.gmra.mrb[0].mxu0 %v554
        %v642 = vpop.f32.mrb[0].mxu0
        %v643 = vadd.f32 0.0, %v642
        %v644 = vpop.f32.mrb[0].mxu0
        %v645 = vpop.f32.mrb[0].mxu0
        %v646 = vpop.f32.mrb[0].mxu0
        %647 = vdwg.mxu0
        %v652 = vunpack.c.l.b16 %v533
        %v653 = vunpack.c.l.b16 %v534
        %v654 = vunpack.c.l.b16 %v535
        %v655 = vunpack.c.l.b16 %v536
        %v656 = vpack.c.b16 %v653, %v652
        %v657 = vpack.c.b16 %v655, %v654
        %660 = vmatprep.subr.bf16.mxu0 0
        %661 = vmatpush1.bf16.msra.mxu0 %v656
        %662 = vmatprep.subr.bf16.mxu0 0
        %663 = vmatpush1.bf16.msra.mxu0 %v657
        %664 = vmatprep.subr.bf16.mxu0 0
        %665 = vmatpush1.bf16.msra.mxu0 0
        %666 = vmatprep.subr.bf16.mxu0 0
        %667 = vmatpush1.bf16.msra.mxu0 0
        %668 = vmatprep.subr.bf16.mxu0 0
        %669 = vmatpush1.bf16.msra.mxu0 0
        %670 = vmatprep.subr.bf16.mxu0 0
        %671 = vmatpush1.bf16.msra.mxu0 0
        %672 = vmatprep.subr.bf16.mxu0 0
        %673 = vmatpush1.bf16.msra.mxu0 0
        %674 = vmatprep.subr.bf16.mxu0 0
        %675 = vmatpush1.bf16.msra.mxu0 0
        %676 = vmatprep.subr.bf16.mxu0 0
        %677 = vmatpush1.bf16.msra.mxu0 0
        %678 = vmatprep.subr.bf16.mxu0 0
        %679 = vmatpush1.bf16.msra.mxu0 0
        %680 = vmatprep.subr.bf16.mxu0 0
        %681 = vmatpush1.bf16.msra.mxu0 0
        %682 = vmatprep.subr.bf16.mxu0 0
        %683 = vmatpush1.bf16.msra.mxu0 0
        %684 = vmatprep.subr.bf16.mxu0 0
        %685 = vmatpush1.bf16.msra.mxu0 0
        %686 = vmatprep.subr.bf16.mxu0 0
        %687 = vmatpush1.bf16.msra.mxu0 0
        %688 = vmatprep.subr.bf16.mxu0 0
        %689 = vmatpush1.bf16.msra.mxu0 0
        %690 = vmatprep.subr.bf16.mxu0 0
        %691 = vmatpush1.bf16.msra.mxu0 0
        %692 = vmatprep.mubr.bf16.mxu0 0
        %693 = vmatmul.mubr.bf16.gmra.mrb[0].mxu0 %v554
        %v694 = vpop.f32.mrb[0].mxu0
        %v695 = vadd.f32 0.0, %v694
        %v696 = vpop.f32.mrb[0].mxu0
        %v697 = vpop.f32.mrb[0].mxu0
        %v698 = vpop.f32.mrb[0].mxu0
        %699 = vdwg.mxu0
        %v704 = vunpack.c.l.b16 %v537
        %v705 = vunpack.c.l.b16 %v538
        %v706 = vunpack.c.l.b16 %v539
        %v707 = vunpack.c.l.b16 %v540
        %v708 = vpack.c.b16 %v705, %v704
        %v709 = vpack.c.b16 %v707, %v706
        %712 = vmatprep.subr.bf16.mxu0 0
        %713 = vmatpush1.bf16.msra.mxu0 %v708
        %714 = vmatprep.subr.bf16.mxu0 0
        %715 = vmatpush1.bf16.msra.mxu0 %v709
        %716 = vmatprep.subr.bf16.mxu0 0
        %717 = vmatpush1.bf16.msra.mxu0 0
        %718 = vmatprep.subr.bf16.mxu0 0
        %719 = vmatpush1.bf16.msra.mxu0 0
        %720 = vmatprep.subr.bf16.mxu0 0
        %721 = vmatpush1.bf16.msra.mxu0 0
        %722 = vmatprep.subr.bf16.mxu0 0
        %723 = vmatpush1.bf16.msra.mxu0 0
        %724 = vmatprep.subr.bf16.mxu0 0
        %725 = vmatpush1.bf16.msra.mxu0 0
        %726 = vmatprep.subr.bf16.mxu0 0
        %727 = vmatpush1.bf16.msra.mxu0 0
        %728 = vmatprep.subr.bf16.mxu0 0
        %729 = vmatpush1.bf16.msra.mxu0 0
        %730 = vmatprep.subr.bf16.mxu0 0
        %731 = vmatpush1.bf16.msra.mxu0 0
        %732 = vmatprep.subr.bf16.mxu0 0
        %733 = vmatpush1.bf16.msra.mxu0 0
        %734 = vmatprep.subr.bf16.mxu0 0
        %735 = vmatpush1.bf16.msra.mxu0 0
        %736 = vmatprep.subr.bf16.mxu0 0
        %737 = vmatpush1.bf16.msra.mxu0 0
        %738 = vmatprep.subr.bf16.mxu0 0
        %739 = vmatpush1.bf16.msra.mxu0 0
        %740 = vmatprep.subr.bf16.mxu0 0
        %741 = vmatpush1.bf16.msra.mxu0 0
        %742 = vmatprep.subr.bf16.mxu0 0
        %743 = vmatpush1.bf16.msra.mxu0 0
        %744 = vmatprep.mubr.bf16.mxu0 0
        %745 = vmatmul.mubr.bf16.gmra.mrb[0].mxu0 %v554
        %v746 = vpop.f32.mrb[0].mxu0
        %v747 = vadd.f32 0.0, %v746
        %v748 = vpop.f32.mrb[0].mxu0
        %v749 = vpop.f32.mrb[0].mxu0
        %v750 = vpop.f32.mrb[0].mxu0
        %751 = vdwg.mxu0
        %v752 = vpack.c.bf16 %v591, %v591
        %v753 = vpack.c.bf16 %v643, %v643
        %v754 = vpack.c.bf16 %v695, %v695
        %v755 = vpack.c.bf16 %v747, %v747
        %v756 = vld [vmem:[%s4] sm:$0xf]
        %v757 = vld [vmem:[%s4 + $0x4] sm:$0xf]
        %v758 = vld [vmem:[%s4 + $0x8] sm:$0xf]
        %v759 = vld [vmem:[%s4 + $0xc] sm:$0xf]
        %v761 = vsel %vm495, %v756, 0
        %763 = vmatprep.subr.bf16.mxu0 0
        %764 = vmatpush1.bf16.xpose.msra.mxu0 %v554
        %765 = vmatprep.subr.bf16.mxu0 0
        %766 = vmatpush1.bf16.xpose.msra.mxu0 0
        %767 = vmatprep.subr.bf16.mxu0 0
        %768 = vmatpush1.bf16.xpose.msra.mxu0 0
        %769 = vmatprep.subr.bf16.mxu0 0
        %770 = vmatpush1.bf16.xpose.msra.mxu0 0
        %771 = vmatprep.subr.bf16.mxu0 0
        %772 = vmatpush1.bf16.xpose.msra.mxu0 0
        %773 = vmatprep.subr.bf16.mxu0 0
        %774 = vmatpush1.bf16.xpose.msra.mxu0 0
        %775 = vmatprep.subr.bf16.mxu0 0
        %776 = vmatpush1.bf16.xpose.msra.mxu0 0
        %777 = vmatprep.subr.bf16.mxu0 0
        %778 = vmatpush1.bf16.xpose.msra.mxu0 0
        %779 = vmatprep.subr.bf16.mxu0 0
        %780 = vmatpush1.bf16.xpose.msra.mxu0 0
        %781 = vmatprep.subr.bf16.mxu0 0
        %782 = vmatpush1.bf16.xpose.msra.mxu0 0
        %783 = vmatprep.subr.bf16.mxu0 0
        %784 = vmatpush1.bf16.xpose.msra.mxu0 0
        %785 = vmatprep.subr.bf16.mxu0 0
        %786 = vmatpush1.bf16.xpose.msra.mxu0 0
        %787 = vmatprep.subr.bf16.mxu0 0
        %788 = vmatpush1.bf16.xpose.msra.mxu0 0
        %789 = vmatprep.subr.bf16.mxu0 0
        %790 = vmatpush1.bf16.xpose.msra.mxu0 0
        %791 = vmatprep.subr.bf16.mxu0 0
        %792 = vmatpush1.bf16.xpose.msra.mxu0 0
        %793 = vmatprep.subr.bf16.mxu0 0
        %794 = vmatpush1.bf16.xpose.msra.mxu0 0
        %795 = vmatprep.mubr.bf16.mxu0 0
        %796 = vmatmul.mubr.bf16.gmra.mrb[0].mxu0 %v761
        %v797 = vpop.f32.mrb[0].mxu0
        %v798 = vadd.f32 0.0, %v797
        %v799 = vpop.f32.mrb[0].mxu0
        %v800 = vpop.f32.mrb[0].mxu0
        %v801 = vpop.f32.mrb[0].mxu0
        %802 = vdwg.mxu0
        %v804 = vsel %vm495, %v757, 0
        %806 = vmatprep.subr.bf16.mxu0 0
        %807 = vmatpush1.bf16.xpose.msra.mxu0 %v554
        %808 = vmatprep.subr.bf16.mxu0 0
        %809 = vmatpush1.bf16.xpose.msra.mxu0 0
        %810 = vmatprep.subr.bf16.mxu0 0
        %811 = vmatpush1.bf16.xpose.msra.mxu0 0
        %812 = vmatprep.subr.bf16.mxu0 0
        %813 = vmatpush1.bf16.xpose.msra.mxu0 0
        %814 = vmatprep.subr.bf16.mxu0 0
        %815 = vmatpush1.bf16.xpose.msra.mxu0 0
        %816 = vmatprep.subr.bf16.mxu0 0
        %817 = vmatpush1.bf16.xpose.msra.mxu0 0
        %818 = vmatprep.subr.bf16.mxu0 0
        %819 = vmatpush1.bf16.xpose.msra.mxu0 0
        %820 = vmatprep.subr.bf16.mxu0 0
        %821 = vmatpush1.bf16.xpose.msra.mxu0 0
        %822 = vmatprep.subr.bf16.mxu0 0
        %823 = vmatpush1.bf16.xpose.msra.mxu0 0
        %824 = vmatprep.subr.bf16.mxu0 0
        %825 = vmatpush1.bf16.xpose.msra.mxu0 0
        %826 = vmatprep.subr.bf16.mxu0 0
        %827 = vmatpush1.bf16.xpose.msra.mxu0 0
        %828 = vmatprep.subr.bf16.mxu0 0
        %829 = vmatpush1.bf16.xpose.msra.mxu0 0
        %830 = vmatprep.subr.bf16.mxu0 0
        %831 = vmatpush1.bf16.xpose.msra.mxu0 0
        %832 = vmatprep.subr.bf16.mxu0 0
        %833 = vmatpush1.bf16.xpose.msra.mxu0 0
        %834 = vmatprep.subr.bf16.mxu0 0
        %835 = vmatpush1.bf16.xpose.msra.mxu0 0
        %836 = vmatprep.subr.bf16.mxu0 0
        %837 = vmatpush1.bf16.xpose.msra.mxu0 0
        %838 = vmatprep.mubr.bf16.mxu0 0
        %839 = vmatmul.mubr.bf16.gmra.mrb[0].mxu0 %v804
        %v840 = vpop.f32.mrb[0].mxu0
        %v841 = vadd.f32 0.0, %v840
        %v842 = vpop.f32.mrb[0].mxu0
        %v843 = vpop.f32.mrb[0].mxu0
        %v844 = vpop.f32.mrb[0].mxu0
        %845 = vdwg.mxu0
        %v847 = vsel %vm495, %v758, 0
        %849 = vmatprep.subr.bf16.mxu0 0
        %850 = vmatpush1.bf16.xpose.msra.mxu0 %v554
        %851 = vmatprep.subr.bf16.mxu0 0
        %852 = vmatpush1.bf16.xpose.msra.mxu0 0
        %853 = vmatprep.subr.bf16.mxu0 0
        %854 = vmatpush1.bf16.xpose.msra.mxu0 0
        %855 = vmatprep.subr.bf16.mxu0 0
        %856 = vmatpush1.bf16.xpose.msra.mxu0 0
        %857 = vmatprep.subr.bf16.mxu0 0
        %858 = vmatpush1.bf16.xpose.msra.mxu0 0
        %859 = vmatprep.subr.bf16.mxu0 0
        %860 = vmatpush1.bf16.xpose.msra.mxu0 0
        %861 = vmatprep.subr.bf16.mxu0 0
        %862 = vmatpush1.bf16.xpose.msra.mxu0 0
        %863 = vmatprep.subr.bf16.mxu0 0
        %864 = vmatpush1.bf16.xpose.msra.mxu0 0
        %865 = vmatprep.subr.bf16.mxu0 0
        %866 = vmatpush1.bf16.xpose.msra.mxu0 0
        %867 = vmatprep.subr.bf16.mxu0 0
        %868 = vmatpush1.bf16.xpose.msra.mxu0 0
        %869 = vmatprep.subr.bf16.mxu0 0
        %870 = vmatpush1.bf16.xpose.msra.mxu0 0
        %871 = vmatprep.subr.bf16.mxu0 0
        %872 = vmatpush1.bf16.xpose.msra.mxu0 0
        %873 = vmatprep.subr.bf16.mxu0 0
        %874 = vmatpush1.bf16.xpose.msra.mxu0 0
        %875 = vmatprep.subr.bf16.mxu0 0
        %876 = vmatpush1.bf16.xpose.msra.mxu0 0
        %877 = vmatprep.subr.bf16.mxu0 0
        %878 = vmatpush1.bf16.xpose.msra.mxu0 0
        %879 = vmatprep.subr.bf16.mxu0 0
        %880 = vmatpush1.bf16.xpose.msra.mxu0 0
        %881 = vmatprep.mubr.bf16.mxu0 0
        %882 = vmatmul.mubr.bf16.gmra.mrb[0].mxu0 %v847
        %v883 = vpop.f32.mrb[0].mxu0
        %v884 = vadd.f32 0.0, %v883
        %v885 = vpop.f32.mrb[0].mxu0
        %v886 = vpop.f32.mrb[0].mxu0
        %v887 = vpop.f32.mrb[0].mxu0
        %888 = vdwg.mxu0
        %v890 = vsel %vm495, %v759, 0
        %892 = vmatprep.subr.bf16.mxu0 0
        %893 = vmatpush1.bf16.xpose.msra.mxu0 %v554
        %894 = vmatprep.subr.bf16.mxu0 0
        %895 = vmatpush1.bf16.xpose.msra.mxu0 0
        %896 = vmatprep.subr.bf16.mxu0 0
        %897 = vmatpush1.bf16.xpose.msra.mxu0 0
        %898 = vmatprep.subr.bf16.mxu0 0
        %899 = vmatpush1.bf16.xpose.msra.mxu0 0
        %900 = vmatprep.subr.bf16.mxu0 0
        %901 = vmatpush1.bf16.xpose.msra.mxu0 0
        %902 = vmatprep.subr.bf16.mxu0 0
        %903 = vmatpush1.bf16.xpose.msra.mxu0 0
        %904 = vmatprep.subr.bf16.mxu0 0
        %905 = vmatpush1.bf16.xpose.msra.mxu0 0
        %906 = vmatprep.subr.bf16.mxu0 0
        %907 = vmatpush1.bf16.xpose.msra.mxu0 0
        %908 = vmatprep.subr.bf16.mxu0 0
        %909 = vmatpush1.bf16.xpose.msra.mxu0 0
        %910 = vmatprep.subr.bf16.mxu0 0
        %911 = vmatpush1.bf16.xpose.msra.mxu0 0
        %912 = vmatprep.subr.bf16.mxu0 0
        %913 = vmatpush1.bf16.xpose.msra.mxu0 0
        %914 = vmatprep.subr.bf16.mxu0 0
        %915 = vmatpush1.bf16.xpose.msra.mxu0 0
        %916 = vmatprep.subr.bf16.mxu0 0
        %917 = vmatpush1.bf16.xpose.msra.mxu0 0
        %918 = vmatprep.subr.bf16.mxu0 0
        %919 = vmatpush1.bf16.xpose.msra.mxu0 0
        %920 = vmatprep.subr.bf16.mxu0 0
        %921 = vmatpush1.bf16.xpose.msra.mxu0 0
        %922 = vmatprep.subr.bf16.mxu0 0
        %923 = vmatpush1.bf16.xpose.msra.mxu0 0
        %924 = vmatprep.mubr.bf16.mxu0 0
        %925 = vmatmul.mubr.bf16.gmra.mrb[0].mxu0 %v890
        %v926 = vpop.f32.mrb[0].mxu0
        %v927 = vadd.f32 0.0, %v926
        %v928 = vpop.f32.mrb[0].mxu0
        %v929 = vpop.f32.mrb[0].mxu0
        %v930 = vpop.f32.mrb[0].mxu0
        %931 = vdwg.mxu0
        %v932 = vpack.c.bf16 %v798, %v798
        %v933 = vpack.c.bf16 %v841, %v841
        %v934 = vpack.c.bf16 %v884, %v884
        %v935 = vpack.c.bf16 %v927, %v927
        %v936 = vld [vmem:[%s5] sm:$0xf]
        %v937 = vld [vmem:[%s5 + $0x4] sm:$0xf]
        %v938 = vld [vmem:[%s5 + $0x8] sm:$0xf]
        %v939 = vld [vmem:[%s5 + $0xc] sm:$0xf]
        %v940 = vld [vmem:[%s5 + $0x10] sm:$0xf]
        %v941 = vld [vmem:[%s5 + $0x14] sm:$0xf]
        %v942 = vld [vmem:[%s5 + $0x18] sm:$0xf]
        %v943 = vld [vmem:[%s5 + $0x1c] sm:$0xf]
        %v944 = vld [vmem:[%s5 + $0x20] sm:$0xf]
        %v945 = vld [vmem:[%s5 + $0x24] sm:$0xf]
        %v946 = vld [vmem:[%s5 + $0x28] sm:$0xf]
        %v947 = vld [vmem:[%s5 + $0x2c] sm:$0xf]
        %v948 = vld [vmem:[%s5 + $0x30] sm:$0xf]
        %v949 = vld [vmem:[%s5 + $0x34] sm:$0xf]
        %v950 = vld [vmem:[%s5 + $0x38] sm:$0xf]
        %v951 = vld [vmem:[%s5 + $0x3c] sm:$0xf]
        %v956 = vunpack.c.l.b16 %v936
        %v957 = vunpack.c.l.b16 %v937
        %v958 = vunpack.c.l.b16 %v938
        %v959 = vunpack.c.l.b16 %v939
        %v960 = vpack.c.b16 %v957, %v956
        %v961 = vpack.c.b16 %v959, %v958
        %964 = vmatprep.subr.bf16.mxu0 0
        %965 = vmatpush1.bf16.msra.mxu0 %v960
        %966 = vmatprep.subr.bf16.mxu0 0
        %967 = vmatpush1.bf16.msra.mxu0 %v961
        %968 = vmatprep.subr.bf16.mxu0 0
        %969 = vmatpush1.bf16.msra.mxu0 0
        %970 = vmatprep.subr.bf16.mxu0 0
        %971 = vmatpush1.bf16.msra.mxu0 0
        %972 = vmatprep.subr.bf16.mxu0 0
        %973 = vmatpush1.bf16.msra.mxu0 0
        %974 = vmatprep.subr.bf16.mxu0 0
        %975 = vmatpush1.bf16.msra.mxu0 0
        %976 = vmatprep.subr.bf16.mxu0 0
        %977 = vmatpush1.bf16.msra.mxu0 0
        %978 = vmatprep.subr.bf16.mxu0 0
        %979 = vmatpush1.bf16.msra.mxu0 0
        %980 = vmatprep.subr.bf16.mxu0 0
        %981 = vmatpush1.bf16.msra.mxu0 0
        %982 = vmatprep.subr.bf16.mxu0 0
        %983 = vmatpush1.bf16.msra.mxu0 0
        %984 = vmatprep.subr.bf16.mxu0 0
        %985 = vmatpush1.bf16.msra.mxu0 0
        %986 = vmatprep.subr.bf16.mxu0 0
        %987 = vmatpush1.bf16.msra.mxu0 0
        %988 = vmatprep.subr.bf16.mxu0 0
        %989 = vmatpush1.bf16.msra.mxu0 0
        %990 = vmatprep.subr.bf16.mxu0 0
        %991 = vmatpush1.bf16.msra.mxu0 0
        %992 = vmatprep.subr.bf16.mxu0 0
        %993 = vmatpush1.bf16.msra.mxu0 0
        %994 = vmatprep.subr.bf16.mxu0 0
        %995 = vmatpush1.bf16.msra.mxu0 0
        %996 = vmatprep.mubr.bf16.mxu0 0
        %997 = vmatmul.mubr.bf16.gmra.mrb[0].mxu0 %v554
        %v998 = vpop.f32.mrb[0].mxu0
        %v999 = vadd.f32 0.0, %v998
        %v1000 = vpop.f32.mrb[0].mxu0
        %v1001 = vpop.f32.mrb[0].mxu0
        %v1002 = vpop.f32.mrb[0].mxu0
        %1003 = vdwg.mxu0
        %v1008 = vunpack.c.l.b16 %v940
        %v1009 = vunpack.c.l.b16 %v941
        %v1010 = vunpack.c.l.b16 %v942
        %v1011 = vunpack.c.l.b16 %v943
        %v1012 = vpack.c.b16 %v1009, %v1008
        %v1013 = vpack.c.b16 %v1011, %v1010
        %1016 = vmatprep.subr.bf16.mxu0 0
        %1017 = vmatpush1.bf16.msra.mxu0 %v1012
        %1018 = vmatprep.subr.bf16.mxu0 0
        %1019 = vmatpush1.bf16.msra.mxu0 %v1013
        %1020 = vmatprep.subr.bf16.mxu0 0
        %1021 = vmatpush1.bf16.msra.mxu0 0
        %1022 = vmatprep.subr.bf16.mxu0 0
        %1023 = vmatpush1.bf16.msra.mxu0 0
        %1024 = vmatprep.subr.bf16.mxu0 0
        %1025 = vmatpush1.bf16.msra.mxu0 0
        %1026 = vmatprep.subr.bf16.mxu0 0
        %1027 = vmatpush1.bf16.msra.mxu0 0
        %1028 = vmatprep.subr.bf16.mxu0 0
        %1029 = vmatpush1.bf16.msra.mxu0 0
        %1030 = vmatprep.subr.bf16.mxu0 0
        %1031 = vmatpush1.bf16.msra.mxu0 0
        %1032 = vmatprep.subr.bf16.mxu0 0
        %1033 = vmatpush1.bf16.msra.mxu0 0
        %1034 = vmatprep.subr.bf16.mxu0 0
        %1035 = vmatpush1.bf16.msra.mxu0 0
        %1036 = vmatprep.subr.bf16.mxu0 0
        %1037 = vmatpush1.bf16.msra.mxu0 0
        %1038 = vmatprep.subr.bf16.mxu0 0
        %1039 = vmatpush1.bf16.msra.mxu0 0
        %1040 = vmatprep.subr.bf16.mxu0 0
        %1041 = vmatpush1.bf16.msra.mxu0 0
        %1042 = vmatprep.subr.bf16.mxu0 0
        %1043 = vmatpush1.bf16.msra.mxu0 0
        %1044 = vmatprep.subr.bf16.mxu0 0
        %1045 = vmatpush1.bf16.msra.mxu0 0
        %1046 = vmatprep.subr.bf16.mxu0 0
        %1047 = vmatpush1.bf16.msra.mxu0 0
        %1048 = vmatprep.mubr.bf16.mxu0 0
        %1049 = vmatmul.mubr.bf16.gmra.mrb[0].mxu0 %v554
        %v1050 = vpop.f32.mrb[0].mxu0
        %v1051 = vadd.f32 0.0, %v1050
        %v1052 = vpop.f32.mrb[0].mxu0
        %v1053 = vpop.f32.mrb[0].mxu0
        %v1054 = vpop.f32.mrb[0].mxu0
        %1055 = vdwg.mxu0
        %v1060 = vunpack.c.l.b16 %v944
        %v1061 = vunpack.c.l.b16 %v945
        %v1062 = vunpack.c.l.b16 %v946
        %v1063 = vunpack.c.l.b16 %v947
        %v1064 = vpack.c.b16 %v1061, %v1060
        %v1065 = vpack.c.b16 %v1063, %v1062
        %1068 = vmatprep.subr.bf16.mxu0 0
        %1069 = vmatpush1.bf16.msra.mxu0 %v1064
        %1070 = vmatprep.subr.bf16.mxu0 0
        %1071 = vmatpush1.bf16.msra.mxu0 %v1065
        %1072 = vmatprep.subr.bf16.mxu0 0
        %1073 = vmatpush1.bf16.msra.mxu0 0
        %1074 = vmatprep.subr.bf16.mxu0 0
        %1075 = vmatpush1.bf16.msra.mxu0 0
        %1076 = vmatprep.subr.bf16.mxu0 0
        %1077 = vmatpush1.bf16.msra.mxu0 0
        %1078 = vmatprep.subr.bf16.mxu0 0
        %1079 = vmatpush1.bf16.msra.mxu0 0
        %1080 = vmatprep.subr.bf16.mxu0 0
        %1081 = vmatpush1.bf16.msra.mxu0 0
        %1082 = vmatprep.subr.bf16.mxu0 0
        %1083 = vmatpush1.bf16.msra.mxu0 0
        %1084 = vmatprep.subr.bf16.mxu0 0
        %1085 = vmatpush1.bf16.msra.mxu0 0
        %1086 = vmatprep.subr.bf16.mxu0 0
        %1087 = vmatpush1.bf16.msra.mxu0 0
        %1088 = vmatprep.subr.bf16.mxu0 0
        %1089 = vmatpush1.bf16.msra.mxu0 0
        %1090 = vmatprep.subr.bf16.mxu0 0
        %1091 = vmatpush1.bf16.msra.mxu0 0
        %1092 = vmatprep.subr.bf16.mxu0 0
        %1093 = vmatpush1.bf16.msra.mxu0 0
        %1094 = vmatprep.subr.bf16.mxu0 0
        %1095 = vmatpush1.bf16.msra.mxu0 0
        %1096 = vmatprep.subr.bf16.mxu0 0
        %1097 = vmatpush1.bf16.msra.mxu0 0
        %1098 = vmatprep.subr.bf16.mxu0 0
        %1099 = vmatpush1.bf16.msra.mxu0 0
        %1100 = vmatprep.mubr.bf16.mxu0 0
        %1101 = vmatmul.mubr.bf16.gmra.mrb[0].mxu0 %v554
        %v1102 = vpop.f32.mrb[0].mxu0
        %v1103 = vadd.f32 0.0, %v1102
        %v1104 = vpop.f32.mrb[0].mxu0
        %v1105 = vpop.f32.mrb[0].mxu0
        %v1106 = vpop.f32.mrb[0].mxu0
        %1107 = vdwg.mxu0
        %v1112 = vunpack.c.l.b16 %v948
        %v1113 = vunpack.c.l.b16 %v949
        %v1114 = vunpack.c.l.b16 %v950
        %v1115 = vunpack.c.l.b16 %v951
        %v1116 = vpack.c.b16 %v1113, %v1112
        %v1117 = vpack.c.b16 %v1115, %v1114
        %1120 = vmatprep.subr.bf16.mxu0 0
        %1121 = vmatpush1.bf16.msra.mxu0 %v1116
        %1122 = vmatprep.subr.bf16.mxu0 0
        %1123 = vmatpush1.bf16.msra.mxu0 %v1117
        %1124 = vmatprep.subr.bf16.mxu0 0
        %1125 = vmatpush1.bf16.msra.mxu0 0
        %1126 = vmatprep.subr.bf16.mxu0 0
        %1127 = vmatpush1.bf16.msra.mxu0 0
        %1128 = vmatprep.subr.bf16.mxu0 0
        %1129 = vmatpush1.bf16.msra.mxu0 0
        %1130 = vmatprep.subr.bf16.mxu0 0
        %1131 = vmatpush1.bf16.msra.mxu0 0
        %1132 = vmatprep.subr.bf16.mxu0 0
        %1133 = vmatpush1.bf16.msra.mxu0 0
        %1134 = vmatprep.subr.bf16.mxu0 0
        %1135 = vmatpush1.bf16.msra.mxu0 0
        %1136 = vmatprep.subr.bf16.mxu0 0
        %1137 = vmatpush1.bf16.msra.mxu0 0
        %1138 = vmatprep.subr.bf16.mxu0 0
        %1139 = vmatpush1.bf16.msra.mxu0 0
        %1140 = vmatprep.subr.bf16.mxu0 0
        %1141 = vmatpush1.bf16.msra.mxu0 0
        %1142 = vmatprep.subr.bf16.mxu0 0
        %1143 = vmatpush1.bf16.msra.mxu0 0
        %1144 = vmatprep.subr.bf16.mxu0 0
        %1145 = vmatpush1.bf16.msra.mxu0 0
        %1146 = vmatprep.subr.bf16.mxu0 0
        %1147 = vmatpush1.bf16.msra.mxu0 0
        %1148 = vmatprep.subr.bf16.mxu0 0
        %1149 = vmatpush1.bf16.msra.mxu0 0
        %1150 = vmatprep.subr.bf16.mxu0 0
        %1151 = vmatpush1.bf16.msra.mxu0 0
        %1152 = vmatprep.mubr.bf16.mxu0 0
        %1153 = vmatmul.mubr.bf16.gmra.mrb[0].mxu0 %v554
        %v1154 = vpop.f32.mrb[0].mxu0
        %v1155 = vadd.f32 0.0, %v1154
        %v1156 = vpop.f32.mrb[0].mxu0
        %v1157 = vpop.f32.mrb[0].mxu0
        %v1158 = vpop.f32.mrb[0].mxu0
        %1159 = vdwg.mxu0
        %v1160 = vpack.c.bf16 %v999, %v999
        %v1161 = vpack.c.bf16 %v1051, %v1051
        %v1162 = vpack.c.bf16 %v1103, %v1103
        %v1163 = vpack.c.bf16 %v1155, %v1155
        %s1164 = smul.u32 %s33, 4
        %s1165 = smul.addr %s1164, 4
        %s1166 = scalar_lea.vmem [#allocation2], %s1165
        %vm1167 = vcmask 60416
        %1168 = vst.msk [vmem:[%s1166] sm:$0xf] %vm1167, %v932
        %1169 = vst.msk [vmem:[%s1166 + $0x4] sm:$0xf] %vm1167, %v933
        %1170 = vst.msk [vmem:[%s1166 + $0x8] sm:$0xf] %vm1167, %v934
        %1171 = vst.msk [vmem:[%s1166 + $0xc] sm:$0xf] %vm1167, %v935
        %s1172 = smul.addr %s1164, 4
        %s1173 = scalar_lea.vmem [#allocation3], %s1172
        %1174 = vst.msk [vmem:[%s1173] sm:$0xf] %vm1167, %v1160
        %1175 = vst.msk [vmem:[%s1173 + $0x4] sm:$0xf] %vm1167, %v1161
        %1176 = vst.msk [vmem:[%s1173 + $0x8] sm:$0xf] %vm1167, %v1162
        %1177 = vst.msk [vmem:[%s1173 + $0xc] sm:$0xf] %vm1167, %v1163
        %s1178 = smul.u32 %s33, 8
        %v1179 = vlaneseq
        %v1180 = vshrl.u32 %v1179, 7
        %v1181 = vstv %s1178
        %v1182 = vadd.s32 %v1181, %v1180
        %s1183 = sadd.s32 %s33, 1
        // While loop
        $region77: #{tpu_custom_call.1} parent=75 // loop_pre_header
          _
        $region78: #{tpu_custom_call.1} parent=75 // loop_header
          %s1185 = sphi 0, %s1187
          %p1186 = scmp.ge.s32.totalorder %s1185, %s1183
          %v1190 = vphi -inf, %v1425
          %v1191 = vphi -inf, %v1426
          %v1192 = vphi -inf, %v1427
          %v1193 = vphi -inf, %v1428
          %v1194 = vphi 0.0, %v1469
          %v1195 = vphi 0.0, %v1470
          %v1196 = vphi 0.0, %v1471
          %v1197 = vphi 0.0, %v1472
          %v1198 = vphi 0.0, %v1665
          %v1199 = vphi 0.0, %v1666
          %v1200 = vphi 0.0, %v1667
          %v1201 = vphi 0.0, %v1668
        $region79: #{tpu_custom_call.1} parent=75 // loop_header_branch
          %1189 = sbr.rel (%p1186) target = $region83
        $region80: #{tpu_custom_call.1} parent=75 // loop_body
          %s1202 = smul.u32 %s1185, 4
          %s1203 = smul.addr %s1202, 4
          %s1204 = scalar_lea.vmem [#allocation2], %s1203
          %v1205 = vld [vmem:[%s1204] sm:$0xf]
          %v1206 = vld [vmem:[%s1204 + $0x4] sm:$0xf]
          %v1207 = vld [vmem:[%s1204 + $0x8] sm:$0xf]
          %v1208 = vld [vmem:[%s1204 + $0xc] sm:$0xf]
          %s1209 = smul.addr %s1202, 4
          %s1210 = scalar_lea.vmem [#allocation3], %s1209
          %v1211 = vld [vmem:[%s1210] sm:$0xf]
          %v1212 = vld [vmem:[%s1210 + $0x4] sm:$0xf]
          %v1213 = vld [vmem:[%s1210 + $0x8] sm:$0xf]
          %v1214 = vld [vmem:[%s1210 + $0xc] sm:$0xf]
          %vm1215 = vcmask 64512
          %v1217 = vsel %vm1215, %v752, 0
          %vm1219 = vcmask 1043456
          %v1221 = vsel %vm1219, %v1205, 0
          %1223 = vmatprep.subr.bf16.mxu0 0
          %1224 = vmatpush1.bf16.msra.mxu0 %v1221
          %1225 = vmatprep.subr.bf16.mxu0 0
          %1226 = vmatpush1.bf16.msra.mxu0 0
          %1227 = vmatprep.subr.bf16.mxu0 0
          %1228 = vmatpush1.bf16.msra.mxu0 0
          %1229 = vmatprep.subr.bf16.mxu0 0
          %1230 = vmatpush1.bf16.msra.mxu0 0
          %1231 = vmatprep.subr.bf16.mxu0 0
          %1232 = vmatpush1.bf16.msra.mxu0 0
          %1233 = vmatprep.subr.bf16.mxu0 0
          %1234 = vmatpush1.bf16.msra.mxu0 0
          %1235 = vmatprep.subr.bf16.mxu0 0
          %1236 = vmatpush1.bf16.msra.mxu0 0
          %1237 = vmatprep.subr.bf16.mxu0 0
          %1238 = vmatpush1.bf16.msra.mxu0 0
          %1239 = vmatprep.subr.bf16.mxu0 0
          %1240 = vmatpush1.bf16.msra.mxu0 0
          %1241 = vmatprep.subr.bf16.mxu0 0
          %1242 = vmatpush1.bf16.msra.mxu0 0
          %1243 = vmatprep.subr.bf16.mxu0 0
          %1244 = vmatpush1.bf16.msra.mxu0 0
          %1245 = vmatprep.subr.bf16.mxu0 0
          %1246 = vmatpush1.bf16.msra.mxu0 0
          %1247 = vmatprep.subr.bf16.mxu0 0
          %1248 = vmatpush1.bf16.msra.mxu0 0
          %1249 = vmatprep.subr.bf16.mxu0 0
          %1250 = vmatpush1.bf16.msra.mxu0 0
          %1251 = vmatprep.subr.bf16.mxu0 0
          %1252 = vmatpush1.bf16.msra.mxu0 0
          %1253 = vmatprep.subr.bf16.mxu0 0
          %1254 = vmatpush1.bf16.msra.mxu0 0
          %1255 = vmatprep.mubr.bf16.mxu0 0
          %1256 = vmatmul.mubr.bf16.gmra.mrb[0].mxu0 %v1217
          %v1257 = vpop.f32.mrb[0].mxu0
          %v1258 = vadd.f32 0.0, %v1257
          %v1259 = vpop.f32.mrb[0].mxu0
          %v1260 = vpop.f32.mrb[0].mxu0
          %v1261 = vpop.f32.mrb[0].mxu0
          %1262 = vdwg.mxu0
          %v1264 = vsel %vm1215, %v753, 0
          %v1267 = vsel %vm1219, %v1206, 0
          %1269 = vmatprep.subr.bf16.mxu0 0
          %1270 = vmatpush1.bf16.msra.mxu0 %v1267
          %1271 = vmatprep.subr.bf16.mxu0 0
          %1272 = vmatpush1.bf16.msra.mxu0 0
          %1273 = vmatprep.subr.bf16.mxu0 0
          %1274 = vmatpush1.bf16.msra.mxu0 0
          %1275 = vmatprep.subr.bf16.mxu0 0
          %1276 = vmatpush1.bf16.msra.mxu0 0
          %1277 = vmatprep.subr.bf16.mxu0 0
          %1278 = vmatpush1.bf16.msra.mxu0 0
          %1279 = vmatprep.subr.bf16.mxu0 0
          %1280 = vmatpush1.bf16.msra.mxu0 0
          %1281 = vmatprep.subr.bf16.mxu0 0
          %1282 = vmatpush1.bf16.msra.mxu0 0
          %1283 = vmatprep.subr.bf16.mxu0 0
          %1284 = vmatpush1.bf16.msra.mxu0 0
          %1285 = vmatprep.subr.bf16.mxu0 0
          %1286 = vmatpush1.bf16.msra.mxu0 0
          %1287 = vmatprep.subr.bf16.mxu0 0
          %1288 = vmatpush1.bf16.msra.mxu0 0
          %1289 = vmatprep.subr.bf16.mxu0 0
          %1290 = vmatpush1.bf16.msra.mxu0 0
          %1291 = vmatprep.subr.bf16.mxu0 0
          %1292 = vmatpush1.bf16.msra.mxu0 0
          %1293 = vmatprep.subr.bf16.mxu0 0
          %1294 = vmatpush1.bf16.msra.mxu0 0
          %1295 = vmatprep.subr.bf16.mxu0 0
          %1296 = vmatpush1.bf16.msra.mxu0 0
          %1297 = vmatprep.subr.bf16.mxu0 0
          %1298 = vmatpush1.bf16.msra.mxu0 0
          %1299 = vmatprep.subr.bf16.mxu0 0
          %1300 = vmatpush1.bf16.msra.mxu0 0
          %1301 = vmatprep.mubr.bf16.mxu0 0
          %1302 = vmatmul.mubr.bf16.gmra.mrb[0].mxu0 %v1264
          %v1303 = vpop.f32.mrb[0].mxu0
          %v1304 = vadd.f32 0.0, %v1303
          %v1305 = vpop.f32.mrb[0].mxu0
          %v1306 = vpop.f32.mrb[0].mxu0
          %v1307 = vpop.f32.mrb[0].mxu0
          %1308 = vdwg.mxu0
          %v1310 = vsel %vm1215, %v754, 0
          %v1313 = vsel %vm1219, %v1207, 0
          %1315 = vmatprep.subr.bf16.mxu0 0
          %1316 = vmatpush1.bf16.msra.mxu0 %v1313
          %1317 = vmatprep.subr.bf16.mxu0 0
          %1318 = vmatpush1.bf16.msra.mxu0 0
          %1319 = vmatprep.subr.bf16.mxu0 0
          %1320 = vmatpush1.bf16.msra.mxu0 0
          %1321 = vmatprep.subr.bf16.mxu0 0
          %1322 = vmatpush1.bf16.msra.mxu0 0
          %1323 = vmatprep.subr.bf16.mxu0 0
          %1324 = vmatpush1.bf16.msra.mxu0 0
          %1325 = vmatprep.subr.bf16.mxu0 0
          %1326 = vmatpush1.bf16.msra.mxu0 0
          %1327 = vmatprep.subr.bf16.mxu0 0
          %1328 = vmatpush1.bf16.msra.mxu0 0
          %1329 = vmatprep.subr.bf16.mxu0 0
          %1330 = vmatpush1.bf16.msra.mxu0 0
          %1331 = vmatprep.subr.bf16.mxu0 0
          %1332 = vmatpush1.bf16.msra.mxu0 0
          %1333 = vmatprep.subr.bf16.mxu0 0
          %1334 = vmatpush1.bf16.msra.mxu0 0
          %1335 = vmatprep.subr.bf16.mxu0 0
          %1336 = vmatpush1.bf16.msra.mxu0 0
          %1337 = vmatprep.subr.bf16.mxu0 0
          %1338 = vmatpush1.bf16.msra.mxu0 0
          %1339 = vmatprep.subr.bf16.mxu0 0
          %1340 = vmatpush1.bf16.msra.mxu0 0
          %1341 = vmatprep.subr.bf16.mxu0 0
          %1342 = vmatpush1.bf16.msra.mxu0 0
          %1343 = vmatprep.subr.bf16.mxu0 0
          %1344 = vmatpush1.bf16.msra.mxu0 0
          %1345 = vmatprep.subr.bf16.mxu0 0
          %1346 = vmatpush1.bf16.msra.mxu0 0
          %1347 = vmatprep.mubr.bf16.mxu0 0
          %1348 = vmatmul.mubr.bf16.gmra.mrb[0].mxu0 %v1310
          %v1349 = vpop.f32.mrb[0].mxu0
          %v1350 = vadd.f32 0.0, %v1349
          %v1351 = vpop.f32.mrb[0].mxu0
          %v1352 = vpop.f32.mrb[0].mxu0
          %v1353 = vpop.f32.mrb[0].mxu0
          %1354 = vdwg.mxu0
          %v1356 = vsel %vm1215, %v755, 0
          %v1359 = vsel %vm1219, %v1208, 0
          %1361 = vmatprep.subr.bf16.mxu0 0
          %1362 = vmatpush1.bf16.msra.mxu0 %v1359
          %1363 = vmatprep.subr.bf16.mxu0 0
          %1364 = vmatpush1.bf16.msra.mxu0 0
          %1365 = vmatprep.subr.bf16.mxu0 0
          %1366 = vmatpush1.bf16.msra.mxu0 0
          %1367 = vmatprep.subr.bf16.mxu0 0
          %1368 = vmatpush1.bf16.msra.mxu0 0
          %1369 = vmatprep.subr.bf16.mxu0 0
          %1370 = vmatpush1.bf16.msra.mxu0 0
          %1371 = vmatprep.subr.bf16.mxu0 0
          %1372 = vmatpush1.bf16.msra.mxu0 0
          %1373 = vmatprep.subr.bf16.mxu0 0
          %1374 = vmatpush1.bf16.msra.mxu0 0
          %1375 = vmatprep.subr.bf16.mxu0 0
          %1376 = vmatpush1.bf16.msra.mxu0 0
          %1377 = vmatprep.subr.bf16.mxu0 0
          %1378 = vmatpush1.bf16.msra.mxu0 0
          %1379 = vmatprep.subr.bf16.mxu0 0
          %1380 = vmatpush1.bf16.msra.mxu0 0
          %1381 = vmatprep.subr.bf16.mxu0 0
          %1382 = vmatpush1.bf16.msra.mxu0 0
          %1383 = vmatprep.subr.bf16.mxu0 0
          %1384 = vmatpush1.bf16.msra.mxu0 0
          %1385 = vmatprep.subr.bf16.mxu0 0
          %1386 = vmatpush1.bf16.msra.mxu0 0
          %1387 = vmatprep.subr.bf16.mxu0 0
          %1388 = vmatpush1.bf16.msra.mxu0 0
          %1389 = vmatprep.subr.bf16.mxu0 0
          %1390 = vmatpush1.bf16.msra.mxu0 0
          %1391 = vmatprep.subr.bf16.mxu0 0
          %1392 = vmatpush1.bf16.msra.mxu0 0
          %1393 = vmatprep.mubr.bf16.mxu0 0
          %1394 = vmatmul.mubr.bf16.gmra.mrb[0].mxu0 %v1356
          %v1395 = vpop.f32.mrb[0].mxu0
          %v1396 = vadd.f32 0.0, %v1395
          %v1397 = vpop.f32.mrb[0].mxu0
          %v1398 = vpop.f32.mrb[0].mxu0
          %v1399 = vpop.f32.mrb[0].mxu0
          %1400 = vdwg.mxu0
          %s1401 = smul.u32 %s1185, 8
          %v1402 = vlaneseq
          %v1403 = vand.u32 %v1402, 127
          %v1404 = vstv %s1401
          %v1405 = vadd.s32 %v1404, %v1403
          %vm1406 = vcmp.ge.s32.totalorder %v1182, %v1405
          %v1407 = vsel %vm1406, 1, 0
          %vm1408 = vcmp.eq.s32.totalorder %v1407, 1
          %v1409 = vsel %vm1408, %v1258, -1e+30
          %v1410 = vsel %vm1408, %v1304, -1e+30
          %v1411 = vsel %vm1408, %v1350, -1e+30
          %v1412 = vsel %vm1408, %v1396, -1e+30
          %v1413 = vsel %vm1215, %v1409, -inf
          %1414 = vmax.xlane.f32.xlu0 %v1413
          %v1415 = vpop.xlane.xlu0 %1414
          %v1416 = vsel %vm1215, %v1410, -inf
          %1417 = vmax.xlane.f32.xlu0 %v1416
          %v1418 = vpop.xlane.xlu0 %1417
          %v1419 = vsel %vm1215, %v1411, -inf
          %1420 = vmax.xlane.f32.xlu0 %v1419
          %v1421 = vpop.xlane.xlu0 %1420
          %v1422 = vsel %vm1215, %v1412, -inf
          %1423 = vmax.xlane.f32.xlu0 %v1422
          %v1424 = vpop.xlane.xlu0 %1423
          %v1425 = vmax.f32 %v1190, %v1415
          %v1426 = vmax.f32 %v1191, %v1418
          %v1427 = vmax.f32 %v1192, %v1421
          %v1428 = vmax.f32 %v1193, %v1424
          %v1429 = vsub.f32 %v1190, %v1425
          %v1430 = vsub.f32 %v1191, %v1426
          %v1431 = vsub.f32 %v1192, %v1427
          %v1432 = vsub.f32 %v1193, %v1428
          %v1433 = vmul.f32 %v1429, 1.442695
          %v1434 = vpow.pop %v1433
          %v1435 = vmul.f32 %v1430, 1.442695
          %v1436 = vpow.pop %v1435
          %v1437 = vmul.f32 %v1431, 1.442695
          %v1438 = vpow.pop %v1437
          %v1439 = vmul.f32 %v1432, 1.442695
          %v1440 = vpow.pop %v1439
          %v1441 = vsub.f32 %v1409, %v1425
          %v1442 = vsub.f32 %v1410, %v1426
          %v1443 = vsub.f32 %v1411, %v1427
          %v1444 = vsub.f32 %v1412, %v1428
          %v1445 = vmul.f32 %v1441, 1.442695
          %v1446 = vpow.pop %v1445
          %v1447 = vmul.f32 %v1442, 1.442695
          %v1448 = vpow.pop %v1447
          %v1449 = vmul.f32 %v1443, 1.442695
          %v1450 = vpow.pop %v1449
          %v1451 = vmul.f32 %v1444, 1.442695
          %v1452 = vpow.pop %v1451
          %v1453 = vmul.f32 %v1434, %v1194
          %v1454 = vmul.f32 %v1436, %v1195
          %v1455 = vmul.f32 %v1438, %v1196
          %v1456 = vmul.f32 %v1440, %v1197
          %v1457 = vsel %vm1215, %v1446, 0.0
          %1458 = vadd.xlane.f32.xlu0 %v1457
          %v1459 = vpop.xlane.xlu0 %1458
          %v1460 = vsel %vm1215, %v1448, 0.0
          %1461 = vadd.xlane.f32.xlu0 %v1460
          %v1462 = vpop.xlane.xlu0 %1461
          %v1463 = vsel %vm1215, %v1450, 0.0
          %1464 = vadd.xlane.f32.xlu0 %v1463
          %v1465 = vpop.xlane.xlu0 %1464
          %v1466 = vsel %vm1215, %v1452, 0.0
          %1467 = vadd.xlane.f32.xlu0 %v1466
          %v1468 = vpop.xlane.xlu0 %1467
          %v1469 = vadd.f32 %v1453, %v1459
          %v1470 = vadd.f32 %v1454, %v1462
          %v1471 = vadd.f32 %v1455, %v1465
          %v1472 = vadd.f32 %v1456, %v1468
          %v1473 = vmul.f32 %v1434, %v1198
          %v1474 = vmul.f32 %v1436, %v1199
          %v1475 = vmul.f32 %v1438, %v1200
          %v1476 = vmul.f32 %v1440, %v1201
          %v1477 = vpack.c.bf16 %v1446, %v1446
          %v1478 = vpack.c.bf16 %v1448, %v1448
          %v1479 = vpack.c.bf16 %v1450, %v1450
          %v1480 = vpack.c.bf16 %v1452, %v1452
          %v1482 = vsel %vm1215, %v1477, 0
          %v1485 = vsel %vm1219, %v1211, 0
          %1487 = vmatprep.subr.bf16.mxu0 0
          %1488 = vmatpush1.bf16.msra.mxu0 %v1485
          %1489 = vmatprep.subr.bf16.mxu0 0
          %1490 = vmatpush1.bf16.msra.mxu0 0
          %1491 = vmatprep.subr.bf16.mxu0 0
          %1492 = vmatpush1.bf16.msra.mxu0 0
          %1493 = vmatprep.subr.bf16.mxu0 0
          %1494 = vmatpush1.bf16.msra.mxu0 0
          %1495 = vmatprep.subr.bf16.mxu0 0
          %1496 = vmatpush1.bf16.msra.mxu0 0
          %1497 = vmatprep.subr.bf16.mxu0 0
          %1498 = vmatpush1.bf16.msra.mxu0 0
          %1499 = vmatprep.subr.bf16.mxu0 0
          %1500 = vmatpush1.bf16.msra.mxu0 0
          %1501 = vmatprep.subr.bf16.mxu0 0
          %1502 = vmatpush1.bf16.msra.mxu0 0
          %1503 = vmatprep.subr.bf16.mxu0 0
          %1504 = vmatpush1.bf16.msra.mxu0 0
          %1505 = vmatprep.subr.bf16.mxu0 0
          %1506 = vmatpush1.bf16.msra.mxu0 0
          %1507 = vmatprep.subr.bf16.mxu0 0
          %1508 = vmatpush1.bf16.msra.mxu0 0
          %1509 = vmatprep.subr.bf16.mxu0 0
          %1510 = vmatpush1.bf16.msra.mxu0 0
          %1511 = vmatprep.subr.bf16.mxu0 0
          %1512 = vmatpush1.bf16.msra.mxu0 0
          %1513 = vmatprep.subr.bf16.mxu0 0
          %1514 = vmatpush1.bf16.msra.mxu0 0
          %1515 = vmatprep.subr.bf16.mxu0 0
          %1516 = vmatpush1.bf16.msra.mxu0 0
          %1517 = vmatprep.subr.bf16.mxu0 0
          %1518 = vmatpush1.bf16.msra.mxu0 0
          %1519 = vmatprep.mubr.bf16.mxu0 0
          %1520 = vmatmul.mubr.bf16.gmra.mrb[0].mxu0 %v1482
          %v1521 = vpop.f32.mrb[0].mxu0
          %v1522 = vadd.f32 0.0, %v1521
          %v1523 = vpop.f32.mrb[0].mxu0
          %v1524 = vpop.f32.mrb[0].mxu0
          %v1525 = vpop.f32.mrb[0].mxu0
          %1526 = vdwg.mxu0
          %v1528 = vsel %vm1215, %v1478, 0
          %v1531 = vsel %vm1219, %v1212, 0
          %1533 = vmatprep.subr.bf16.mxu0 0
          %1534 = vmatpush1.bf16.msra.mxu0 %v1531
          %1535 = vmatprep.subr.bf16.mxu0 0
          %1536 = vmatpush1.bf16.msra.mxu0 0
          %1537 = vmatprep.subr.bf16.mxu0 0
          %1538 = vmatpush1.bf16.msra.mxu0 0
          %1539 = vmatprep.subr.bf16.mxu0 0
          %1540 = vmatpush1.bf16.msra.mxu0 0
          %1541 = vmatprep.subr.bf16.mxu0 0
          %1542 = vmatpush1.bf16.msra.mxu0 0
          %1543 = vmatprep.subr.bf16.mxu0 0
          %1544 = vmatpush1.bf16.msra.mxu0 0
          %1545 = vmatprep.subr.bf16.mxu0 0
          %1546 = vmatpush1.bf16.msra.mxu0 0
          %1547 = vmatprep.subr.bf16.mxu0 0
          %1548 = vmatpush1.bf16.msra.mxu0 0
          %1549 = vmatprep.subr.bf16.mxu0 0
          %1550 = vmatpush1.bf16.msra.mxu0 0
          %1551 = vmatprep.subr.bf16.mxu0 0
          %1552 = vmatpush1.bf16.msra.mxu0 0
          %1553 = vmatprep.subr.bf16.mxu0 0
          %1554 = vmatpush1.bf16.msra.mxu0 0
          %1555 = vmatprep.subr.bf16.mxu0 0
          %1556 = vmatpush1.bf16.msra.mxu0 0
          %1557 = vmatprep.subr.bf16.mxu0 0
          %1558 = vmatpush1.bf16.msra.mxu0 0
          %1559 = vmatprep.subr.bf16.mxu0 0
          %1560 = vmatpush1.bf16.msra.mxu0 0
          %1561 = vmatprep.subr.bf16.mxu0 0
          %1562 = vmatpush1.bf16.msra.mxu0 0
          %1563 = vmatprep.subr.bf16.mxu0 0
          %1564 = vmatpush1.bf16.msra.mxu0 0
          %1565 = vmatprep.mubr.bf16.mxu0 0
          %1566 = vmatmul.mubr.bf16.gmra.mrb[0].mxu0 %v1528
          %v1567 = vpop.f32.mrb[0].mxu0
          %v1568 = vadd.f32 0.0, %v1567
          %v1569 = vpop.f32.mrb[0].mxu0
          %v1570 = vpop.f32.mrb[0].mxu0
          %v1571 = vpop.f32.mrb[0].mxu0
          %1572 = vdwg.mxu0
          %v1574 = vsel %vm1215, %v1479, 0
          %v1577 = vsel %vm1219, %v1213, 0
          %1579 = vmatprep.subr.bf16.mxu0 0
          %1580 = vmatpush1.bf16.msra.mxu0 %v1577
          %1581 = vmatprep.subr.bf16.mxu0 0
          %1582 = vmatpush1.bf16.msra.mxu0 0
          %1583 = vmatprep.subr.bf16.mxu0 0
          %1584 = vmatpush1.bf16.msra.mxu0 0
          %1585 = vmatprep.subr.bf16.mxu0 0
          %1586 = vmatpush1.bf16.msra.mxu0 0
          %1587 = vmatprep.subr.bf16.mxu0 0
          %1588 = vmatpush1.bf16.msra.mxu0 0
          %1589 = vmatprep.subr.bf16.mxu0 0
          %1590 = vmatpush1.bf16.msra.mxu0 0
          %1591 = vmatprep.subr.bf16.mxu0 0
          %1592 = vmatpush1.bf16.msra.mxu0 0
          %1593 = vmatprep.subr.bf16.mxu0 0
          %1594 = vmatpush1.bf16.msra.mxu0 0
          %1595 = vmatprep.subr.bf16.mxu0 0
          %1596 = vmatpush1.bf16.msra.mxu0 0
          %1597 = vmatprep.subr.bf16.mxu0 0
          %1598 = vmatpush1.bf16.msra.mxu0 0
          %1599 = vmatprep.subr.bf16.mxu0 0
          %1600 = vmatpush1.bf16.msra.mxu0 0
          %1601 = vmatprep.subr.bf16.mxu0 0
          %1602 = vmatpush1.bf16.msra.mxu0 0
          %1603 = vmatprep.subr.bf16.mxu0 0
          %1604 = vmatpush1.bf16.msra.mxu0 0
          %1605 = vmatprep.subr.bf16.mxu0 0
          %1606 = vmatpush1.bf16.msra.mxu0 0
          %1607 = vmatprep.subr.bf16.mxu0 0
          %1608 = vmatpush1.bf16.msra.mxu0 0
          %1609 = vmatprep.subr.bf16.mxu0 0
          %1610 = vmatpush1.bf16.msra.mxu0 0
          %1611 = vmatprep.mubr.bf16.mxu0 0
          %1612 = vmatmul.mubr.bf16.gmra.mrb[0].mxu0 %v1574
          %v1613 = vpop.f32.mrb[0].mxu0
          %v1614 = vadd.f32 0.0, %v1613
          %v1615 = vpop.f32.mrb[0].mxu0
          %v1616 = vpop.f32.mrb[0].mxu0
          %v1617 = vpop.f32.mrb[0].mxu0
          %1618 = vdwg.mxu0
          %v1620 = vsel %vm1215, %v1480, 0
          %v1623 = vsel %vm1219, %v1214, 0
          %1625 = vmatprep.subr.bf16.mxu0 0
          %1626 = vmatpush1.bf16.msra.mxu0 %v1623
          %1627 = vmatprep.subr.bf16.mxu0 0
          %1628 = vmatpush1.bf16.msra.mxu0 0
          %1629 = vmatprep.subr.bf16.mxu0 0
          %1630 = vmatpush1.bf16.msra.mxu0 0
          %1631 = vmatprep.subr.bf16.mxu0 0
          %1632 = vmatpush1.bf16.msra.mxu0 0
          %1633 = vmatprep.subr.bf16.mxu0 0
          %1634 = vmatpush1.bf16.msra.mxu0 0
          %1635 = vmatprep.subr.bf16.mxu0 0
          %1636 = vmatpush1.bf16.msra.mxu0 0
          %1637 = vmatprep.subr.bf16.mxu0 0
          %1638 = vmatpush1.bf16.msra.mxu0 0
          %1639 = vmatprep.subr.bf16.mxu0 0
          %1640 = vmatpush1.bf16.msra.mxu0 0
          %1641 = vmatprep.subr.bf16.mxu0 0
          %1642 = vmatpush1.bf16.msra.mxu0 0
          %1643 = vmatprep.subr.bf16.mxu0 0
          %1644 = vmatpush1.bf16.msra.mxu0 0
          %1645 = vmatprep.subr.bf16.mxu0 0
          %1646 = vmatpush1.bf16.msra.mxu0 0
          %1647 = vmatprep.subr.bf16.mxu0 0
          %1648 = vmatpush1.bf16.msra.mxu0 0
          %1649 = vmatprep.subr.bf16.mxu0 0
          %1650 = vmatpush1.bf16.msra.mxu0 0
          %1651 = vmatprep.subr.bf16.mxu0 0
          %1652 = vmatpush1.bf16.msra.mxu0 0
          %1653 = vmatprep.subr.bf16.mxu0 0
          %1654 = vmatpush1.bf16.msra.mxu0 0
          %1655 = vmatprep.subr.bf16.mxu0 0
          %1656 = vmatpush1.bf16.msra.mxu0 0
          %1657 = vmatprep.mubr.bf16.mxu0 0
          %1658 = vmatmul.mubr.bf16.gmra.mrb[0].mxu0 %v1620
          %v1659 = vpop.f32.mrb[0].mxu0
          %v1660 = vadd.f32 0.0, %v1659
          %v1661 = vpop.f32.mrb[0].mxu0
          %v1662 = vpop.f32.mrb[0].mxu0
          %v1663 = vpop.f32.mrb[0].mxu0
          %1664 = vdwg.mxu0
          %v1665 = vadd.f32 %v1473, %v1522
          %v1666 = vadd.f32 %v1474, %v1568
          %v1667 = vadd.f32 %v1475, %v1614
          %v1668 = vadd.f32 %v1476, %v1660
        $region81: #{tpu_custom_call.1} parent=75 // loop_footer
          %s1187 = sadd.s32 %s1185, 1
        $region82: #{tpu_custom_call.1} parent=75 // loop_footer_branch
          %1184 = sbr.rel target = $region78
        $region83: #{tpu_custom_call.1} parent=75 // loop_exit
          _
        %v1669 = vrcp.pop %v1194
        %v1670 = vrcp.pop %v1195
        %v1671 = vrcp.pop %v1196
        %v1672 = vrcp.pop %v1197
        %v1673 = vmul.f32 %v1198, %v1669
        %v1674 = vmul.f32 %v1199, %v1670
        %v1675 = vmul.f32 %v1200, %v1671
        %v1676 = vmul.f32 %v1201, %v1672
        %v1677 = vpack.c.bf16 %v1673, %v1673
        %v1678 = vpack.c.bf16 %v1674, %v1674
        %v1679 = vpack.c.bf16 %v1675, %v1675
        %v1680 = vpack.c.bf16 %v1676, %v1676
        %v1681 = vld [vmem:[%s6] sm:$0xf]
        %v1682 = vld [vmem:[%s6 + $0x4] sm:$0xf]
        %v1683 = vld [vmem:[%s6 + $0x8] sm:$0xf]
        %v1684 = vld [vmem:[%s6 + $0xc] sm:$0xf]
        %vm1685 = vcmask 64512
        %v1687 = vsel %vm1685, %v1677, 0
        %vm1689 = vcmask 1043456
        %v1691 = vsel %vm1689, %v1681, 0
        %1693 = vmatprep.subr.bf16.mxu0 0
        %1694 = vmatpush1.bf16.msra.mxu0 %v1691
        %1695 = vmatprep.subr.bf16.mxu0 0
        %1696 = vmatpush1.bf16.msra.mxu0 0
        %1697 = vmatprep.subr.bf16.mxu0 0
        %1698 = vmatpush1.bf16.msra.mxu0 0
        %1699 = vmatprep.subr.bf16.mxu0 0
        %1700 = vmatpush1.bf16.msra.mxu0 0
        %1701 = vmatprep.subr.bf16.mxu0 0
        %1702 = vmatpush1.bf16.msra.mxu0 0
        %1703 = vmatprep.subr.bf16.mxu0 0
        %1704 = vmatpush1.bf16.msra.mxu0 0
        %1705 = vmatprep.subr.bf16.mxu0 0
        %1706 = vmatpush1.bf16.msra.mxu0 0
        %1707 = vmatprep.subr.bf16.mxu0 0
        %1708 = vmatpush1.bf16.msra.mxu0 0
        %1709 = vmatprep.subr.bf16.mxu0 0
        %1710 = vmatpush1.bf16.msra.mxu0 0
        %1711 = vmatprep.subr.bf16.mxu0 0
        %1712 = vmatpush1.bf16.msra.mxu0 0
        %1713 = vmatprep.subr.bf16.mxu0 0
        %1714 = vmatpush1.bf16.msra.mxu0 0
        %1715 = vmatprep.subr.bf16.mxu0 0
        %1716 = vmatpush1.bf16.msra.mxu0 0
        %1717 = vmatprep.subr.bf16.mxu0 0
        %1718 = vmatpush1.bf16.msra.mxu0 0
        %1719 = vmatprep.subr.bf16.mxu0 0
        %1720 = vmatpush1.bf16.msra.mxu0 0
        %1721 = vmatprep.subr.bf16.mxu0 0
        %1722 = vmatpush1.bf16.msra.mxu0 0
        %1723 = vmatprep.subr.bf16.mxu0 0
        %1724 = vmatpush1.bf16.msra.mxu0 0
        %1725 = vmatprep.mubr.bf16.mxu0 0
        %1726 = vmatmul.mubr.bf16.gmra.mrb[0].mxu0 %v1687
        %v1727 = vpop.f32.mrb[0].mxu0
        %v1728 = vadd.f32 0.0, %v1727
        %v1729 = vpop.f32.mrb[0].mxu0
        %v1730 = vpop.f32.mrb[0].mxu0
        %v1731 = vpop.f32.mrb[0].mxu0
        %1732 = vdwg.mxu0
        %v1734 = vsel %vm1685, %v1678, 0
        %v1737 = vsel %vm1689, %v1682, 0
        %1739 = vmatprep.subr.bf16.mxu0 0
        %1740 = vmatpush1.bf16.msra.mxu0 %v1737
        %1741 = vmatprep.subr.bf16.mxu0 0
        %1742 = vmatpush1.bf16.msra.mxu0 0
        %1743 = vmatprep.subr.bf16.mxu0 0
        %1744 = vmatpush1.bf16.msra.mxu0 0
        %1745 = vmatprep.subr.bf16.mxu0 0
        %1746 = vmatpush1.bf16.msra.mxu0 0
        %1747 = vmatprep.subr.bf16.mxu0 0
        %1748 = vmatpush1.bf16.msra.mxu0 0
        %1749 = vmatprep.subr.bf16.mxu0 0
        %1750 = vmatpush1.bf16.msra.mxu0 0
        %1751 = vmatprep.subr.bf16.mxu0 0
        %1752 = vmatpush1.bf16.msra.mxu0 0
        %1753 = vmatprep.subr.bf16.mxu0 0
        %1754 = vmatpush1.bf16.msra.mxu0 0
        %1755 = vmatprep.subr.bf16.mxu0 0
        %1756 = vmatpush1.bf16.msra.mxu0 0
        %1757 = vmatprep.subr.bf16.mxu0 0
        %1758 = vmatpush1.bf16.msra.mxu0 0
        %1759 = vmatprep.subr.bf16.mxu0 0
        %1760 = vmatpush1.bf16.msra.mxu0 0
        %1761 = vmatprep.subr.bf16.mxu0 0
        %1762 = vmatpush1.bf16.msra.mxu0 0
        %1763 = vmatprep.subr.bf16.mxu0 0
        %1764 = vmatpush1.bf16.msra.mxu0 0
        %1765 = vmatprep.subr.bf16.mxu0 0
        %1766 = vmatpush1.bf16.msra.mxu0 0
        %1767 = vmatprep.subr.bf16.mxu0 0
        %1768 = vmatpush1.bf16.msra.mxu0 0
        %1769 = vmatprep.subr.bf16.mxu0 0
        %1770 = vmatpush1.bf16.msra.mxu0 0
        %1771 = vmatprep.mubr.bf16.mxu0 0
        %1772 = vmatmul.mubr.bf16.gmra.mrb[0].mxu0 %v1734
        %v1773 = vpop.f32.mrb[0].mxu0
        %v1774 = vadd.f32 0.0, %v1773
        %v1775 = vpop.f32.mrb[0].mxu0
        %v1776 = vpop.f32.mrb[0].mxu0
        %v1777 = vpop.f32.mrb[0].mxu0
        %1778 = vdwg.mxu0
        %v1780 = vsel %vm1685, %v1679, 0
        %v1783 = vsel %vm1689, %v1683, 0
        %1785 = vmatprep.subr.bf16.mxu0 0
        %1786 = vmatpush1.bf16.msra.mxu0 %v1783
        %1787 = vmatprep.subr.bf16.mxu0 0
        %1788 = vmatpush1.bf16.msra.mxu0 0
        %1789 = vmatprep.subr.bf16.mxu0 0
        %1790 = vmatpush1.bf16.msra.mxu0 0
        %1791 = vmatprep.subr.bf16.mxu0 0
        %1792 = vmatpush1.bf16.msra.mxu0 0
        %1793 = vmatprep.subr.bf16.mxu0 0
        %1794 = vmatpush1.bf16.msra.mxu0 0
        %1795 = vmatprep.subr.bf16.mxu0 0
        %1796 = vmatpush1.bf16.msra.mxu0 0
        %1797 = vmatprep.subr.bf16.mxu0 0
        %1798 = vmatpush1.bf16.msra.mxu0 0
        %1799 = vmatprep.subr.bf16.mxu0 0
        %1800 = vmatpush1.bf16.msra.mxu0 0
        %1801 = vmatprep.subr.bf16.mxu0 0
        %1802 = vmatpush1.bf16.msra.mxu0 0
        %1803 = vmatprep.subr.bf16.mxu0 0
        %1804 = vmatpush1.bf16.msra.mxu0 0
        %1805 = vmatprep.subr.bf16.mxu0 0
        %1806 = vmatpush1.bf16.msra.mxu0 0
        %1807 = vmatprep.subr.bf16.mxu0 0
        %1808 = vmatpush1.bf16.msra.mxu0 0
        %1809 = vmatprep.subr.bf16.mxu0 0
        %1810 = vmatpush1.bf16.msra.mxu0 0
        %1811 = vmatprep.subr.bf16.mxu0 0
        %1812 = vmatpush1.bf16.msra.mxu0 0
        %1813 = vmatprep.subr.bf16.mxu0 0
        %1814 = vmatpush1.bf16.msra.mxu0 0
        %1815 = vmatprep.subr.bf16.mxu0 0
        %1816 = vmatpush1.bf16.msra.mxu0 0
        %1817 = vmatprep.mubr.bf16.mxu0 0
        %1818 = vmatmul.mubr.bf16.gmra.mrb[0].mxu0 %v1780
        %v1819 = vpop.f32.mrb[0].mxu0
        %v1820 = vadd.f32 0.0, %v1819
        %v1821 = vpop.f32.mrb[0].mxu0
        %v1822 = vpop.f32.mrb[0].mxu0
        %v1823 = vpop.f32.mrb[0].mxu0
        %1824 = vdwg.mxu0
        %v1826 = vsel %vm1685, %v1680, 0
        %v1829 = vsel %vm1689, %v1684, 0
        %1831 = vmatprep.subr.bf16.mxu0 0
        %1832 = vmatpush1.bf16.msra.mxu0 %v1829
        %1833 = vmatprep.subr.bf16.mxu0 0
        %1834 = vmatpush1.bf16.msra.mxu0 0
        %1835 = vmatprep.subr.bf16.mxu0 0
        %1836 = vmatpush1.bf16.msra.mxu0 0
        %1837 = vmatprep.subr.bf16.mxu0 0
        %1838 = vmatpush1.bf16.msra.mxu0 0
        %1839 = vmatprep.subr.bf16.mxu0 0
        %1840 = vmatpush1.bf16.msra.mxu0 0
        %1841 = vmatprep.subr.bf16.mxu0 0
        %1842 = vmatpush1.bf16.msra.mxu0 0
        %1843 = vmatprep.subr.bf16.mxu0 0
        %1844 = vmatpush1.bf16.msra.mxu0 0
        %1845 = vmatprep.subr.bf16.mxu0 0
        %1846 = vmatpush1.bf16.msra.mxu0 0
        %1847 = vmatprep.subr.bf16.mxu0 0
        %1848 = vmatpush1.bf16.msra.mxu0 0
        %1849 = vmatprep.subr.bf16.mxu0 0
        %1850 = vmatpush1.bf16.msra.mxu0 0
        %1851 = vmatprep.subr.bf16.mxu0 0
        %1852 = vmatpush1.bf16.msra.mxu0 0
        %1853 = vmatprep.subr.bf16.mxu0 0
        %1854 = vmatpush1.bf16.msra.mxu0 0
        %1855 = vmatprep.subr.bf16.mxu0 0
        %1856 = vmatpush1.bf16.msra.mxu0 0
        %1857 = vmatprep.subr.bf16.mxu0 0
        %1858 = vmatpush1.bf16.msra.mxu0 0
        %1859 = vmatprep.subr.bf16.mxu0 0
        %1860 = vmatpush1.bf16.msra.mxu0 0
        %1861 = vmatprep.subr.bf16.mxu0 0
        %1862 = vmatpush1.bf16.msra.mxu0 0
        %1863 = vmatprep.mubr.bf16.mxu0 0
        %1864 = vmatmul.mubr.bf16.gmra.mrb[0].mxu0 %v1826
        %v1865 = vpop.f32.mrb[0].mxu0
        %v1866 = vadd.f32 0.0, %v1865
        %v1867 = vpop.f32.mrb[0].mxu0
        %v1868 = vpop.f32.mrb[0].mxu0
        %v1869 = vpop.f32.mrb[0].mxu0
        %1870 = vdwg.mxu0
        %v1871 = vsel %vm495, %v1728, 0.0
        %v1872 = vsel %vm495, %v1774, 0.0
        %v1873 = vadd.f32 %v1871, %v1872
        %v1874 = vsel %vm495, %v1820, 0.0
        %v1875 = vadd.f32 %v1873, %v1874
        %v1876 = vsel %vm495, %v1866, 0.0
        %v1877 = vadd.f32 %v1875, %v1876
        %v1878 = vld [vmem:[%s7] sm:$0x1]
        %v1880 = vlaneseq
        %v1881 = vshrl.u32 %v1880, 7
        %v1882 = vsub.s32 0, %v1881
        %v1883 = vrot.slane %v1878, %v1882
        %v1885 = vadd.f32 %v1877, %v1883
        %v1886 = vadd.f32 %v492, %v1885
        %v1887 = vld [vmem:[%s8] sm:$0x1]
        %v1888 = vld [vmem:[%s9] sm:$0x1]
        %v1889 = vsel %vm495, %v1886, 0.0
        %1890 = vadd.xlane.f32.xlu0 %v1889
        %v1891 = vpop.xlane.xlu0 %1890
        %v1892 = vmul.f32 %v1891, %v499
        %v1893 = vsub.f32 %v1886, %v1892
        %v1894 = vmul.f32 %v1893, %v1893
        %v1895 = vsel %vm495, %v1894, 0.0
        %1896 = vadd.xlane.f32.xlu0 %v1895
        %v1897 = vpop.xlane.xlu0 %1896
        %v1898 = vmul.f32 %v1897, %v499
        %v1899 = vadd.f32 %v1898, 1e-05
        %v1900 = vrsqrt.pop %v1899
        %v1901 = vmul.f32 %v1893, %v1900
        %v1903 = vlaneseq
        %v1904 = vshrl.u32 %v1903, 7
        %v1905 = vsub.s32 0, %v1904
        %v1906 = vrot.slane %v1887, %v1905
        %v1908 = vmul.f32 %v1901, %v1906
        %v1910 = vlaneseq
        %v1911 = vshrl.u32 %v1910, 7
        %v1912 = vsub.s32 0, %v1911
        %v1913 = vrot.slane %v1888, %v1912
        %v1915 = vadd.f32 %v1908, %v1913
        %v1916 = vpack.c.bf16 %v1915, %v1915
        %v1917 = vld [vmem:[%s10] sm:$0xf]
        %v1918 = vld [vmem:[%s10 + $0x4] sm:$0xf]
        %v1919 = vld [vmem:[%s10 + $0x8] sm:$0xf]
        %v1920 = vld [vmem:[%s10 + $0xc] sm:$0xf]
        %v1921 = vld [vmem:[%s11] sm:$0x1]
        %v1923 = vlaneseq
        %v1924 = vshrl.u32 %v1923, 7
        %v1925 = vsub.s32 0, %v1924
        %v1926 = vrot.slane %v1921, %v1925
        %v1932 = vunpack.c.l.b16 %v1917
        %v1933 = vunpack.c.l.b16 %v1918
        %v1934 = vunpack.c.l.b16 %v1919
        %v1935 = vunpack.c.l.b16 %v1920
        %v1936 = vpack.c.b16 %v1933, %v1932
        %v1937 = vpack.c.b16 %v1935, %v1934
        %v1941 = vsel %vm495, %v1916, 0
        %1943 = vmatprep.subr.bf16.mxu0 0
        %1944 = vmatpush1.bf16.msra.mxu0 %v1936
        %1945 = vmatprep.subr.bf16.mxu0 0
        %1946 = vmatpush1.bf16.msra.mxu0 %v1937
        %1947 = vmatprep.subr.bf16.mxu0 0
        %1948 = vmatpush1.bf16.msra.mxu0 0
        %1949 = vmatprep.subr.bf16.mxu0 0
        %1950 = vmatpush1.bf16.msra.mxu0 0
        %1951 = vmatprep.subr.bf16.mxu0 0
        %1952 = vmatpush1.bf16.msra.mxu0 0
        %1953 = vmatprep.subr.bf16.mxu0 0
        %1954 = vmatpush1.bf16.msra.mxu0 0
        %1955 = vmatprep.subr.bf16.mxu0 0
        %1956 = vmatpush1.bf16.msra.mxu0 0
        %1957 = vmatprep.subr.bf16.mxu0 0
        %1958 = vmatpush1.bf16.msra.mxu0 0
        %1959 = vmatprep.subr.bf16.mxu0 0
        %1960 = vmatpush1.bf16.msra.mxu0 0
        %1961 = vmatprep.subr.bf16.mxu0 0
        %1962 = vmatpush1.bf16.msra.mxu0 0
        %1963 = vmatprep.subr.bf16.mxu0 0
        %1964 = vmatpush1.bf16.msra.mxu0 0
        %1965 = vmatprep.subr.bf16.mxu0 0
        %1966 = vmatpush1.bf16.msra.mxu0 0
        %1967 = vmatprep.subr.bf16.mxu0 0
        %1968 = vmatpush1.bf16.msra.mxu0 0
        %1969 = vmatprep.subr.bf16.mxu0 0
        %1970 = vmatpush1.bf16.msra.mxu0 0
        %1971 = vmatprep.subr.bf16.mxu0 0
        %1972 = vmatpush1.bf16.msra.mxu0 0
        %1973 = vmatprep.subr.bf16.mxu0 0
        %1974 = vmatpush1.bf16.msra.mxu0 0
        %1975 = vmatprep.mubr.bf16.mxu0 0
        %1976 = vmatmul.mubr.bf16.gmra.mrb[0].mxu0 %v1941
        %v1977 = vpop.f32.mrb[0].mxu0
        %v1978 = vadd.f32 %v1926, %v1977
        %v1979 = vpop.f32.mrb[0].mxu0
        %v1980 = vpop.f32.mrb[0].mxu0
        %v1981 = vpop.f32.mrb[0].mxu0
        %1982 = vdwg.mxu0
        %v1983 = vmax.f32 %v1978, 0.0
        %v1984 = vpack.c.bf16 %v1983, %v1983
        %v1985 = vld [vmem:[%s12] sm:$0xf]
        %v1986 = vld [vmem:[%s12 + $0x4] sm:$0xf]
        %v1987 = vld [vmem:[%s12 + $0x8] sm:$0xf]
        %v1988 = vld [vmem:[%s12 + $0xc] sm:$0xf]
        %v1989 = vld [vmem:[%s12 + $0x10] sm:$0xf]
        %v1990 = vld [vmem:[%s12 + $0x14] sm:$0xf]
        %v1991 = vld [vmem:[%s12 + $0x18] sm:$0xf]
        %v1992 = vld [vmem:[%s12 + $0x1c] sm:$0xf]
        %v1993 = vld [vmem:[%s12 + $0x20] sm:$0xf]
        %v1994 = vld [vmem:[%s12 + $0x24] sm:$0xf]
        %v1995 = vld [vmem:[%s12 + $0x28] sm:$0xf]
        %v1996 = vld [vmem:[%s12 + $0x2c] sm:$0xf]
        %v1997 = vld [vmem:[%s12 + $0x30] sm:$0xf]
        %v1998 = vld [vmem:[%s12 + $0x34] sm:$0xf]
        %v1999 = vld [vmem:[%s12 + $0x38] sm:$0xf]
        %v2000 = vld [vmem:[%s12 + $0x3c] sm:$0xf]
        %v2001 = vld [vmem:[%s13] sm:$0x1]
        %v2003 = vlaneseq
        %v2004 = vshrl.u32 %v2003, 7
        %v2005 = vsub.s32 0, %v2004
        %v2006 = vrot.slane %v2001, %v2005
        %v2024 = vunpack.c.l.b16 %v1985
        %v2025 = vunpack.c.l.b16 %v1986
        %v2026 = vunpack.c.l.b16 %v1987
        %v2027 = vunpack.c.l.b16 %v1988
        %v2028 = vunpack.c.l.b16 %v1989
        %v2029 = vunpack.c.l.b16 %v1990
        %v2030 = vunpack.c.l.b16 %v1991
        %v2031 = vunpack.c.l.b16 %v1992
        %v2032 = vunpack.c.l.b16 %v1993
        %v2033 = vunpack.c.l.b16 %v1994
        %v2034 = vunpack.c.l.b16 %v1995
        %v2035 = vunpack.c.l.b16 %v1996
        %v2036 = vunpack.c.l.b16 %v1997
        %v2037 = vunpack.c.l.b16 %v1998
        %v2038 = vunpack.c.l.b16 %v1999
        %v2039 = vunpack.c.l.b16 %v2000
        %v2040 = vpack.c.b16 %v2025, %v2024
        %v2041 = vpack.c.b16 %v2027, %v2026
        %v2042 = vpack.c.b16 %v2029, %v2028
        %v2043 = vpack.c.b16 %v2031, %v2030
        %v2044 = vpack.c.b16 %v2033, %v2032
        %v2045 = vpack.c.b16 %v2035, %v2034
        %v2046 = vpack.c.b16 %v2037, %v2036
        %v2047 = vpack.c.b16 %v2039, %v2038
        %2056 = vmatprep.subr.bf16.mxu0 0
        %2057 = vmatpush1.bf16.msra.mxu0 %v2040
        %2058 = vmatprep.subr.bf16.mxu0 0
        %2059 = vmatpush1.bf16.msra.mxu0 %v2041
        %2060 = vmatprep.subr.bf16.mxu0 0
        %2061 = vmatpush1.bf16.msra.mxu0 %v2042
        %2062 = vmatprep.subr.bf16.mxu0 0
        %2063 = vmatpush1.bf16.msra.mxu0 %v2043
        %2064 = vmatprep.subr.bf16.mxu0 0
        %2065 = vmatpush1.bf16.msra.mxu0 %v2044
        %2066 = vmatprep.subr.bf16.mxu0 0
        %2067 = vmatpush1.bf16.msra.mxu0 %v2045
        %2068 = vmatprep.subr.bf16.mxu0 0
        %2069 = vmatpush1.bf16.msra.mxu0 %v2046
        %2070 = vmatprep.subr.bf16.mxu0 0
        %2071 = vmatpush1.bf16.msra.mxu0 %v2047
        %2072 = vmatprep.subr.bf16.mxu0 0
        %2073 = vmatpush1.bf16.msra.mxu0 0
        %2074 = vmatprep.subr.bf16.mxu0 0
        %2075 = vmatpush1.bf16.msra.mxu0 0
        %2076 = vmatprep.subr.bf16.mxu0 0
        %2077 = vmatpush1.bf16.msra.mxu0 0
        %2078 = vmatprep.subr.bf16.mxu0 0
        %2079 = vmatpush1.bf16.msra.mxu0 0
        %2080 = vmatprep.subr.bf16.mxu0 0
        %2081 = vmatpush1.bf16.msra.mxu0 0
        %2082 = vmatprep.subr.bf16.mxu0 0
        %2083 = vmatpush1.bf16.msra.mxu0 0
        %2084 = vmatprep.subr.bf16.mxu0 0
        %2085 = vmatpush1.bf16.msra.mxu0 0
        %2086 = vmatprep.subr.bf16.mxu0 0
        %2087 = vmatpush1.bf16.msra.mxu0 0
        %2088 = vmatprep.mubr.bf16.mxu0 0
        %2089 = vmatmul.mubr.bf16.gmra.mrb[0].mxu0 %v1984
        %v2090 = vpop.f32.mrb[0].mxu0
        %v2091 = vadd.f32 %v2006, %v2090
        %v2092 = vpop.f32.mrb[0].mxu0
        %v2093 = vpop.f32.mrb[0].mxu0
        %v2094 = vpop.f32.mrb[0].mxu0
        %2095 = vdwg.mxu0
        %v2096 = vadd.f32 %v1886, %v2091
        %2097 = vst.msk [vmem:[%s482] sm:$0xff] %vm495, %v2096
        %s2098 = sand.u32 %s351, 1
        %s2099 = scalar_lea.sflag [#allocation5], %s2098
        %s2100 = sand.u32 %s351, 1
        %s2101 = smul.addr %s2100, 8
        %s2102 = scalar_lea.vmem [#allocation4], %s2101
        // Predicated region
        $region84: #{tpu_custom_call.1} parent=75 // pred_check
          %p2103 = pneg %p361
        $region85: #{tpu_custom_call.1} parent=75 // pred_check_branch
          %2105 = sbr.rel (%p2103) target = $region87
        $region86: #{tpu_custom_call.1} parent=75 // pred_region
          %s2107 = ssub.s32 128, 128
          %2108 = vsyncadd %s2099, %s2107
          %s2109 = smul.addr %s32, 2
          %s2110 = sadd.s32 %s33, %s2109
          %s2111 = smul.addr %s2110, 128
          %s2112 = scalar_lea.hbm %s14, %s2111
          %s2114 = sshll.u32 %s2102, 4
          %s2115 = int_to_ptr.vmem [resolvable:$true] %s2114
          %2117 = dma.vmem_to_hbm [thread:$0]  %s2115, 128, %s2112, %s2099
        $region87: #{tpu_custom_call.1} parent=75 // pred_fallthru
          _
      $region76: #{tpu_custom_call.1} parent=5 // pred_fallthru
        _
      %p2118 = scmp.le.s32.totalorder 2, %s23
      // Predicated region
      $region88: #{tpu_custom_call.1} parent=5 // pred_check
        %p2119 = pneg %p2118
      $region89: #{tpu_custom_call.1} parent=5 // pred_check_branch
        %2121 = sbr.rel (%p2119) target = $region91
      $region90: #{tpu_custom_call.1} parent=5 // pred_region
        %s2122 = ssub.s32 %s23, 2
        // Predicated region
        $region92: #{tpu_custom_call.1} parent=90 // pred_check
          %p2123 = pneg %p367
        $region93: #{tpu_custom_call.1} parent=90 // pred_check_branch
          %2125 = sbr.rel (%p2123) target = $region95
        $region94: #{tpu_custom_call.1} parent=90 // pred_region
          %s2126 = sand.u32 %s352, 1
          %s2127 = scalar_lea.sflag [#allocation5], %s2126
          %s2128 = sand.u32 %s352, 1
          %s2129 = smul.addr %s2128, 8
          %s2130 = scalar_lea.vmem [#allocation4], %s2129
          %2131 = dma.done %s2127, 128
        $region95: #{tpu_custom_call.1} parent=90 // pred_fallthru
          _
      $region91: #{tpu_custom_call.1} parent=5 // pred_fallthru
        _
    $region6: #{tpu_custom_call.1} parent=1 // loop_footer
      %s27 = sadd.s32 1, %s23
    $region7: #{tpu_custom_call.1} parent=1 // loop_footer_branch
      %22 = sbr.rel target = $region3
    $region8: #{tpu_custom_call.1} parent=1 // loop_exit
      _
    %2132 = vsyncpa [#allocation5], 1
    %s2133 = scalar_lea.sflag [#allocation5], 1
    %2134 = vsyncpa %s2133, 1

</llo_original>
